<compile_context>
chip_gen: v5e
topology: v5e:2x2
jax: 0.10.0
libtpu: 0.0.40
codegen_flags: <defaults>
</compile_context>

<pallas_src>
import functools

import jax
import jax.numpy as jnp
import numpy as np
from jax import lax
from jax.experimental import pallas as pl
from jax.experimental.pallas import tpu as pltpu


def _matmul_nt(a, b):
    # a: (M, K), b: (N, K) -> (M, N), contraction on the last dim of both.
    return lax.dot_general(
        a, b, (((1,), (1,)), ((), ())), preferred_element_type=jnp.float32
    )


def ct_attention_kernel(
    x_ref,      # (1, N, C)          matmul_dtype
    oh_ref,     # (1, N, CL)         float32 one-hot of idx_cluster
    wqkv_ref,   # (H, C, 3*hd)       per-head fused [q*scale | k | v] weights
    wp_ref,     # (H, hd, C)         per-head output-projection weights
    bp_ref,     # (1, C)             float32 proj bias
    out_ref,    # (1, N, C)          float32 token output (resident across clusters)
    attn_ref,   # (1, CT, H, N, N)   float32: CT clusters' attn_map tiles per step
    s_scr,      # VMEM (H, N, N) f32 raw per-head scores, persists across cluster steps
    *,
    num_head,
    head_dim,
    eps,
    mm_dtype,
):
    step = pl.program_id(1)
    cluster_tile = attn_ref.shape[1]
    n_cluster = oh_ref.shape[2]
    n_tok = x_ref.shape[1]
    c_out = out_ref.shape[2]

    # ---- heavy work only on the first cluster step of each batch -------------
    @pl.when(step == 0)
    def _():
        x = x_ref[0]                     # (N, C)
        oh = oh_ref[0]                   # (N, CL) exact 0/1
        same = _matmul_nt(oh, oh)        # (N, N): 1.0 iff same cluster (exact)

        # Initialize the resident output block with the proj bias; each head
        # accumulates its projected contribution into it (no head concat).
        out_ref[0] = jnp.broadcast_to(bp_ref[...], (n_tok, c_out)).astype(out_ref.dtype)

        def head_body(h, carry):
            # One fused qkv matmul per head: (N, C) @ (C, 3*hd) -> (N, 3*hd).
            qkv = jnp.dot(x, wqkv_ref[h], preferred_element_type=jnp.float32)
            qh = qkv[:, 0:head_dim]                    # scale already folded in
            kh = qkv[:, head_dim:2 * head_dim]
            vh = qkv[:, 2 * head_dim:3 * head_dim]

            s = _matmul_nt(qh.astype(mm_dtype), kh.astype(mm_dtype))   # (N, N)
            s_scr[h] = s                 # cache raw scores for the attn_map tiles

            # attn = attn_map.sum(cluster) == scores masked to same-cluster pairs;
            # keep torch's masked_fill(attn == 0) semantics exactly, exact divide.
            a = s * same
            a = jnp.where(a == 0.0, jnp.float32(-1.0e9), a)
            a = jnp.exp(a)
            denom = jnp.sum(a, axis=-1, keepdims=True) + eps
            a = (a + eps / n_tok) / denom

            av = jnp.dot(a.astype(mm_dtype), vh.astype(mm_dtype),
                         preferred_element_type=jnp.float32)           # (N, hd)
            out_ref[0] += jnp.dot(av.astype(mm_dtype), wp_ref[h],
                                  preferred_element_type=jnp.float32)  # (N, C)
            return carry

        lax.fori_loop(0, num_head, head_body, 0, unroll=True)

    # ---- every cluster step: mask cached scores, emit this step's tiles ------
    oh = oh_ref[0]                                          # (N, CL), per-batch block
    for t in range(cluster_tile):                           # static, small
        c = step * cluster_tile + t
        sel = (lax.broadcasted_iota(jnp.int32, (1, n_cluster), 1) == c)
        oh_sel = oh * sel.astype(jnp.float32)               # keep only column c
        mask = _matmul_nt(oh_sel, oh)                       # (N, N) = oh[:,c] outer oh[:,c]
        attn_ref[0, t] = s_scr[...] * mask                  # (H, N, N): single fused store


def _pick_cluster_tile(cluster_num, num_head, n_tok, budget_bytes=8 * 1024 * 1024):
    """Largest divisor of cluster_num whose double-buffered attn tile fits budget."""
    per_cluster = 2 * num_head * n_tok * n_tok * 4          # double-buffered f32
    best = 1
    for t in range(1, cluster_num + 1):
        if cluster_num % t == 0 and t * per_cluster <= budget_bytes:
            best = t
    return best


def ct_attention(x_token, x_path, idx_cluster, cluster_num, params, num_head,
                 matmul_dtype=jnp.float32, cluster_tile=None):
    """CTAttention forward.  matmul_dtype=jnp.bfloat16 routes every matmul through
    the bf16 MXU path (f32 accumulation) on v5e/v6e/v7x; default f32 reproduces the
    torch numerics.  Returns (x_token_out, attn_map)."""
    del x_path  # unused in the reference forward (dead code)
    B, N, C = x_token.shape
    assert C % num_head == 0
    hd = C // num_head
    scale = float(hd) ** (-0.5)
    eps = 1e-6

    if cluster_tile is None:
        cluster_tile = _pick_cluster_tile(cluster_num, num_head, N)
    assert cluster_num % cluster_tile == 0

    onehot = jax.nn.one_hot(idx_cluster, cluster_num, dtype=jnp.float32)   # (B, N, CL)

    # torch Linear weight is (out, in): y = x @ W.T.  Pre-split per head and fuse
    # q|k|v along the output dim so the kernel does one (N,C)@(C,3hd) matmul per
    # head; fold scale into the q columns.
    def per_head_in(w):                     # (out, in) -> (H, in=C, hd)
        return jnp.transpose(w.T.astype(jnp.float32).reshape(C, num_head, hd),
                             (1, 0, 2))

    wq_h = per_head_in(params["wq"]) * scale
    wk_h = per_head_in(params["wk"])
    wv_h = per_head_in(params["wv"])
    wqkv_h = jnp.concatenate([wq_h, wk_h, wv_h], axis=-1).astype(matmul_dtype)  # (H,C,3hd)
    wp_h = (params["wproj"].T.astype(jnp.float32)
            .reshape(num_head, hd, C).astype(matmul_dtype))                     # (H,hd,C)
    bproj = params["bproj"].reshape(1, C).astype(jnp.float32)
    x_in = x_token.astype(matmul_dtype)

    kernel = functools.partial(ct_attention_kernel, num_head=num_head, head_dim=hd,
                               eps=eps, mm_dtype=matmul_dtype)

    out_shapes = (
        jax.ShapeDtypeStruct((B, N, C), jnp.float32),
        jax.ShapeDtypeStruct((B, cluster_num, num_head, N, N), jnp.float32),
    )

    grid_spec = pltpu.PrefetchScalarGridSpec(
        num_scalar_prefetch=0,
        grid=(B, cluster_num // cluster_tile),
        in_specs=[
            pl.BlockSpec((1, N, C), lambda b, c: (b, 0, 0)),
            pl.BlockSpec((1, N, cluster_num), lambda b, c: (b, 0, 0)),
            # Grid-invariant weights: block index never changes -> fetched once.
            pl.BlockSpec((num_head, C, 3 * hd), lambda b, c: (0, 0, 0)),
            pl.BlockSpec((num_head, hd, C), lambda b, c: (0, 0, 0)),
            pl.BlockSpec((1, C), lambda b, c: (0, 0)),
        ],
        out_specs=[
            pl.BlockSpec((1, N, C), lambda b, c: (b, 0, 0)),
            pl.BlockSpec((1, cluster_tile, num_head, N, N),
                         lambda b, c: (b, c, 0, 0, 0)),
        ],
        scratch_shapes=[pltpu.VMEM((num_head, N, N), jnp.float32)],
    )

    return pl.pallas_call(
        kernel,
        out_shape=out_shapes,
        grid_spec=grid_spec,
        compiler_params=pltpu.CompilerParams(
            # Cluster axis revisits the token-output block and reuses the score
            # scratch -> must stay "arbitrary"; batch axis shards across TCs.
            dimension_semantics=("parallel", "arbitrary"),
            # 48 MiB leaves double-buffer headroom on v7x (64 MiB physical);
            # v5e/v6e (128 MiB) could raise this further with bigger cluster tiles.
            vmem_limit_bytes=48 * 1024 * 1024,
        ),
    )(x_in, onehot, wqkv_h, wp_h, bproj)


def ct_attention_ref(x_token, idx_cluster, cluster_num, params, num_head):
    """Pure-JAX reference mirroring the torch forward semantics."""
    B, N, C = x_token.shape
    hd = C // num_head
    scale = float(hd) ** (-0.5)
    eps = 1e-6

    q = x_token @ params["wq"].T
    k = x_token @ params["wk"].T
    v = (x_token @ params["wv"].T).reshape(B, N, num_head, hd).transpose(0, 2, 1, 3)

    oh = jax.nn.one_hot(idx_cluster, cluster_num, dtype=jnp.float32)  # (B,N,CL)
    mask = jnp.transpose(oh, (0, 2, 1))[..., None]                    # (B,CL,N,1)
    q_ = mask * q[:, None]                                            # (B,CL,N,C)
    k_ = mask * k[:, None]
    q_ = q_.reshape(B, cluster_num, N, num_head, hd).transpose(0, 1, 3, 2, 4)
    k_ = k_.reshape(B, cluster_num, N, num_head, hd).transpose(0, 1, 3, 2, 4)

    attn_map = jnp.einsum("bchid,bchjd->bchij", q_, k_) * scale       # (B,CL,H,N,N)
    attn = attn_map.sum(axis=1)                                       # (B,H,N,N)
    attn = jnp.where(attn == 0.0, -1.0e9, attn)
    attn = jnp.exp(attn)
    attn = (attn + eps / N) / (attn.sum(axis=-1, keepdims=True) + eps)

    out = jnp.einsum("bhij,bhjd->bhid", attn, v)
    out = out.transpose(0, 2, 1, 3).reshape(B, N, C)
    out = out @ params["wproj"].T + params["bproj"]
    return out, attn_map


if __name__ == "__main__":
    B, N, C = 2, 8, 32
    num_head = 4
    cluster_num = 4
    pdim = 16

    key = jax.random.PRNGKey(0)
    keys = jax.random.split(key, 8)
    x_token = jax.random.normal(keys[0], (B, N, C), dtype=jnp.float32)
    x_path = jax.random.normal(keys[1], (B, N, pdim), dtype=jnp.float32)  # unused
    idx_cluster = jax.random.randint(keys[2], (B, N), 0, cluster_num)

    # Deterministic synthetic parameters (torch Linear weight shape: (out, in)).
    params = {
        "wq": 0.05 * jax.random.normal(keys[3], (C, C), dtype=jnp.float32),
        "wk": 0.05 * jax.random.normal(keys[4], (C, C), dtype=jnp.float32),
        "wv": 0.05 * jax.random.normal(keys[5], (C, C), dtype=jnp.float32),
        "wproj": 0.05 * jax.random.normal(keys[6], (C, C), dtype=jnp.float32),
        "bproj": 0.05 * jax.random.normal(keys[7], (C,), dtype=jnp.float32),
        # to_pv / pproj params exist in __init__ but are unused in forward.
    }

    out_tok, attn_map = ct_attention(
        x_token, x_path, idx_cluster, cluster_num, params, num_head
    )
    out_tok = jax.block_until_ready(out_tok)
    attn_map = jax.block_until_ready(attn_map)

    ref_tok, ref_map = ct_attention_ref(
        x_token, idx_cluster, cluster_num, params, num_head
    )

    assert out_tok.shape == (B, N, C)
    assert attn_map.shape == (B, cluster_num, num_head, N, N)
    # attn_map is pre-softmax: tight tolerance (only matmul-association differences).
    np.testing.assert_allclose(np.asarray(attn_map), np.asarray(ref_map),
                               rtol=1e-4, atol=1e-5)
    # token output: exact-division softmax path, only f32 rounding differences remain.
    np.testing.assert_allclose(np.asarray(out_tok), np.asarray(ref_tok),
                               rtol=1e-3, atol=1e-4)
    print("KERNEL_OK")
</pallas_src>

<mosaic_0001>
module attributes {stable_mosaic.version = 11 : i64} {
  func.func @ct_attention_kernel(%arg0: i32, %arg1: i32, %arg2: memref<1x8x32xf32, #tpu.memory_space<vmem>>, %arg3: memref<1x8x4xf32, #tpu.memory_space<vmem>>, %arg4: memref<4x32x24xf32, #tpu.memory_space<vmem>>, %arg5: memref<4x8x32xf32, #tpu.memory_space<vmem>>, %arg6: memref<1x32xf32, #tpu.memory_space<vmem>>, %arg7: memref<1x8x32xf32, #tpu.memory_space<vmem>>, %arg8: memref<1x4x4x8x8xf32, #tpu.memory_space<vmem>>, %arg9: memref<4x8x8xf32, #tpu.memory_space<vmem>>) attributes {dimension_semantics = [#tpu.dimension_semantics<parallel>, #tpu.dimension_semantics<arbitrary>], iteration_bounds = array<i64: 2, 1>, scalar_prefetch = 0 : i64, scratch_operands = 1 : i64, tpu.core_type = #tpu.core_type<tc>, window_params = [{transform_indices = @transform_0, window_bounds = array<i64: 1, 8, 32>}, {transform_indices = @transform_1, window_bounds = array<i64: 1, 8, 4>}, {pipeline_mode = #tpu.pipeline_mode<synchronous>, transform_indices = @transform_2, window_bounds = array<i64: 4, 32, 24>}, {pipeline_mode = #tpu.pipeline_mode<synchronous>, transform_indices = @transform_3, window_bounds = array<i64: 4, 8, 32>}, {pipeline_mode = #tpu.pipeline_mode<synchronous>, transform_indices = @transform_4, window_bounds = array<i64: 1, 32>}, {transform_indices = @transform_5, window_bounds = array<i64: 1, 8, 32>}, {transform_indices = @transform_6, window_bounds = array<i64: 1, 4, 4, 8, 8>}]} {
    %c0_i32 = arith.constant 0 : i32
    %0 = arith.cmpi eq, %arg1, %c0_i32 : i32
    %1 = arith.extui %0 : i1 to i32
    %c0_i32_0 = arith.constant 0 : i32
    %2 = arith.cmpi ne, %1, %c0_i32_0 : i32
    scf.if %2 {
      %c0_39 = arith.constant 0 : index
      %c0_40 = arith.constant 0 : index
      %c0_41 = arith.constant 0 : index
      %73 = vector.load %arg2[%c0_39, %c0_40, %c0_41] : memref<1x8x32xf32, #tpu.memory_space<vmem>>, vector<1x8x32xf32>
      %74 = vector.shape_cast %73 : vector<1x8x32xf32> to vector<8x32xf32>
      %c0_42 = arith.constant 0 : index
      %c0_43 = arith.constant 0 : index
      %c0_44 = arith.constant 0 : index
      %75 = vector.load %arg3[%c0_42, %c0_43, %c0_44] : memref<1x8x4xf32, #tpu.memory_space<vmem>>, vector<1x8x4xf32>
      %76 = vector.shape_cast %75 : vector<1x8x4xf32> to vector<8x4xf32>
      %cst_45 = arith.constant dense<0.000000e+00> : vector<8x8xf32>
      %77 = tpu.matmul %76, %76, %cst_45 {dimension_numbers = #tpu.dot_dimension_numbers<[1], [1], [0], [0], [0, 0, 1, 0], [], []>} : vector<8x4xf32>, vector<8x4xf32>, vector<8x8xf32> -> vector<8x8xf32>
      %c0_46 = arith.constant 0 : index
      %c0_47 = arith.constant 0 : index
      %78 = vector.load %arg6[%c0_46, %c0_47] : memref<1x32xf32, #tpu.memory_space<vmem>>, vector<1x32xf32>
      %79 = vector.shape_cast %78 : vector<1x32xf32> to vector<1x32xf32>
      %80 = vector.broadcast %79 : vector<1x32xf32> to vector<8x32xf32>
      %c0_48 = arith.constant 0 : index
      %c0_49 = arith.constant 0 : index
      %c0_50 = arith.constant 0 : index
      %81 = vector.load %arg7[%c0_48, %c0_49, %c0_50] : memref<1x8x32xf32, #tpu.memory_space<vmem>>, vector<1x8x32xf32>
      %82 = vector.shape_cast %81 : vector<1x8x32xf32> to vector<8x32xf32>
      %83 = vector.shape_cast %80 : vector<8x32xf32> to vector<1x8x32xf32>
      tpu.vector_store %arg7[%c0_48, %c0_49, %c0_50], %83 {strides = array<i32>} : memref<1x8x32xf32, #tpu.memory_space<vmem>>, vector<1x8x32xf32>,
      %c0_i32_51 = arith.constant 0 : i32
      %84 = arith.index_cast %c0_i32_51 : i32 to index
      %c0_52 = arith.constant 0 : index
      %c0_53 = arith.constant 0 : index
      %85 = vector.load %arg4[%84, %c0_52, %c0_53] : memref<4x32x24xf32, #tpu.memory_space<vmem>>, vector<1x32x24xf32>
      %86 = vector.shape_cast %85 : vector<1x32x24xf32> to vector<32x24xf32>
      %cst_54 = arith.constant dense<0.000000e+00> : vector<8x24xf32>
      %87 = tpu.matmul %74, %86, %cst_54 {dimension_numbers = #tpu.dot_dimension_numbers<[1], [0], [0], [1], [0, 0, 1, 1], [], []>} : vector<8x32xf32>, vector<32x24xf32>, vector<8x24xf32> -> vector<8x24xf32>
      %88 = vector.extract_strided_slice %87 {offsets = [0, 0], sizes = [8, 8], strides = [1, 1]} : vector<8x24xf32> to vector<8x8xf32>
      %89 = vector.extract_strided_slice %87 {offsets = [0, 8], sizes = [8, 8], strides = [1, 1]} : vector<8x24xf32> to vector<8x8xf32>
      %90 = vector.extract_strided_slice %87 {offsets = [0, 16], sizes = [8, 8], strides = [1, 1]} : vector<8x24xf32> to vector<8x8xf32>
      %cst_55 = arith.constant dense<0.000000e+00> : vector<8x8xf32>
      %91 = tpu.matmul %88, %89, %cst_55 {dimension_numbers = #tpu.dot_dimension_numbers<[1], [1], [0], [0], [0, 0, 1, 0], [], []>} : vector<8x8xf32>, vector<8x8xf32>, vector<8x8xf32> -> vector<8x8xf32>
      %92 = arith.index_cast %c0_i32_51 : i32 to index
      %c0_56 = arith.constant 0 : index
      %c0_57 = arith.constant 0 : index
      %93 = vector.load %arg9[%92, %c0_56, %c0_57] : memref<4x8x8xf32, #tpu.memory_space<vmem>>, vector<1x8x8xf32>
      %94 = vector.shape_cast %93 : vector<1x8x8xf32> to vector<8x8xf32>
      %95 = vector.shape_cast %91 : vector<8x8xf32> to vector<1x8x8xf32>
      tpu.vector_store %arg9[%92, %c0_56, %c0_57], %95 {strides = array<i32>} : memref<4x8x8xf32, #tpu.memory_space<vmem>>, vector<1x8x8xf32>,
      %96 = arith.mulf %91, %77 : vector<8x8xf32>
      %cst_58 = arith.constant 0.000000e+00 : f32
      %97 = vector.broadcast %cst_58 : f32 to vector<8x8xf32>
      %98 = arith.cmpf oeq, %96, %97 : vector<8x8xf32>
      %cst_59 = arith.constant -1.000000e+09 : f32
      %99 = vector.broadcast %cst_59 : f32 to vector<8x8xf32>
      %100 = arith.select %98, %99, %96 : vector<8x8xi1>, vector<8x8xf32>
      %101 = math.exp %100 : vector<8x8xf32>
      %cst_60 = arith.constant dense<0.000000e+00> : vector<8xf32>
      %102 = vector.multi_reduction <add>, %101, %cst_60 [1] : vector<8x8xf32> to vector<8xf32>
      %103 = vector.shape_cast %102 : vector<8xf32> to vector<8x1xf32>
      %cst_61 = arith.constant 9.99999997E-7 : f32
      %104 = vector.broadcast %cst_61 : f32 to vector<8x1xf32>
      %105 = arith.addf %103, %104 : vector<8x1xf32>
      %cst_62 = arith.constant 1.250000e-07 : f32
      %106 = vector.broadcast %cst_62 : f32 to vector<8x8xf32>
      %107 = arith.addf %101, %106 : vector<8x8xf32>
      %108 = vector.broadcast %105 : vector<8x1xf32> to vector<8x8xf32>
      %109 = arith.divf %107, %108 : vector<8x8xf32>
      %cst_63 = arith.constant dense<0.000000e+00> : vector<8x8xf32>
      %110 = tpu.matmul %109, %90, %cst_63 {dimension_numbers = #tpu.dot_dimension_numbers<[1], [0], [0], [1], [0, 0, 1, 1], [], []>} : vector<8x8xf32>, vector<8x8xf32>, vector<8x8xf32> -> vector<8x8xf32>
      %c0_64 = arith.constant 0 : index
      %c0_65 = arith.constant 0 : index
      %c0_66 = arith.constant 0 : index
      %111 = vector.load %arg7[%c0_64, %c0_65, %c0_66] : memref<1x8x32xf32, #tpu.memory_space<vmem>>, vector<1x8x32xf32>
      %112 = vector.shape_cast %111 : vector<1x8x32xf32> to vector<8x32xf32>
      %113 = arith.index_cast %c0_i32_51 : i32 to index
      %c0_67 = arith.constant 0 : index
      %c0_68 = arith.constant 0 : index
      %114 = vector.load %arg5[%113, %c0_67, %c0_68] : memref<4x8x32xf32, #tpu.memory_space<vmem>>, vector<1x8x32xf32>
      %115 = vector.shape_cast %114 : vector<1x8x32xf32> to vector<8x32xf32>
      %cst_69 = arith.constant dense<0.000000e+00> : vector<8x32xf32>
      %116 = tpu.matmul %110, %115, %cst_69 {dimension_numbers = #tpu.dot_dimension_numbers<[1], [0], [0], [1], [0, 0, 1, 1], [], []>} : vector<8x8xf32>, vector<8x32xf32>, vector<8x32xf32> -> vector<8x32xf32>
      %117 = arith.addf %112, %116 : vector<8x32xf32>
      %c0_70 = arith.constant 0 : index
      %c0_71 = arith.constant 0 : index
      %c0_72 = arith.constant 0 : index
      %118 = vector.load %arg7[%c0_70, %c0_71, %c0_72] : memref<1x8x32xf32, #tpu.memory_space<vmem>>, vector<1x8x32xf32>
      %119 = vector.shape_cast %118 : vector<1x8x32xf32> to vector<8x32xf32>
      %120 = vector.shape_cast %117 : vector<8x32xf32> to vector<1x8x32xf32>
      tpu.vector_store %arg7[%c0_70, %c0_71, %c0_72], %120 {strides = array<i32>} : memref<1x8x32xf32, #tpu.memory_space<vmem>>, vector<1x8x32xf32>,
      %c1_i32_73 = arith.constant 1 : i32
      %121 = arith.index_cast %c1_i32_73 : i32 to index
      %c0_74 = arith.constant 0 : index
      %c0_75 = arith.constant 0 : index
      %122 = vector.load %arg4[%121, %c0_74, %c0_75] : memref<4x32x24xf32, #tpu.memory_space<vmem>>, vector<1x32x24xf32>
      %123 = vector.shape_cast %122 : vector<1x32x24xf32> to vector<32x24xf32>
      %cst_76 = arith.constant dense<0.000000e+00> : vector<8x24xf32>
      %124 = tpu.matmul %74, %123, %cst_76 {dimension_numbers = #tpu.dot_dimension_numbers<[1], [0], [0], [1], [0, 0, 1, 1], [], []>} : vector<8x32xf32>, vector<32x24xf32>, vector<8x24xf32> -> vector<8x24xf32>
      %125 = vector.extract_strided_slice %124 {offsets = [0, 0], sizes = [8, 8], strides = [1, 1]} : vector<8x24xf32> to vector<8x8xf32>
      %126 = vector.extract_strided_slice %124 {offsets = [0, 8], sizes = [8, 8], strides = [1, 1]} : vector<8x24xf32> to vector<8x8xf32>
      %127 = vector.extract_strided_slice %124 {offsets = [0, 16], sizes = [8, 8], strides = [1, 1]} : vector<8x24xf32> to vector<8x8xf32>
      %cst_77 = arith.constant dense<0.000000e+00> : vector<8x8xf32>
      %128 = tpu.matmul %125, %126, %cst_77 {dimension_numbers = #tpu.dot_dimension_numbers<[1], [1], [0], [0], [0, 0, 1, 0], [], []>} : vector<8x8xf32>, vector<8x8xf32>, vector<8x8xf32> -> vector<8x8xf32>
      %129 = arith.index_cast %c1_i32_73 : i32 to index
      %c0_78 = arith.constant 0 : index
      %c0_79 = arith.constant 0 : index
      %130 = vector.load %arg9[%129, %c0_78, %c0_79] : memref<4x8x8xf32, #tpu.memory_space<vmem>>, vector<1x8x8xf32>
      %131 = vector.shape_cast %130 : vector<1x8x8xf32> to vector<8x8xf32>
      %132 = vector.shape_cast %128 : vector<8x8xf32> to vector<1x8x8xf32>
      tpu.vector_store %arg9[%129, %c0_78, %c0_79], %132 {strides = array<i32>} : memref<4x8x8xf32, #tpu.memory_space<vmem>>, vector<1x8x8xf32>,
      %133 = arith.mulf %128, %77 : vector<8x8xf32>
      %cst_80 = arith.constant 0.000000e+00 : f32
      %134 = vector.broadcast %cst_80 : f32 to vector<8x8xf32>
      %135 = arith.cmpf oeq, %133, %134 : vector<8x8xf32>
      %cst_81 = arith.constant -1.000000e+09 : f32
      %136 = vector.broadcast %cst_81 : f32 to vector<8x8xf32>
      %137 = arith.select %135, %136, %133 : vector<8x8xi1>, vector<8x8xf32>
      %138 = math.exp %137 : vector<8x8xf32>
      %cst_82 = arith.constant dense<0.000000e+00> : vector<8xf32>
      %139 = vector.multi_reduction <add>, %138, %cst_82 [1] : vector<8x8xf32> to vector<8xf32>
      %140 = vector.shape_cast %139 : vector<8xf32> to vector<8x1xf32>
      %cst_83 = arith.constant 9.99999997E-7 : f32
      %141 = vector.broadcast %cst_83 : f32 to vector<8x1xf32>
      %142 = arith.addf %140, %141 : vector<8x1xf32>
      %cst_84 = arith.constant 1.250000e-07 : f32
      %143 = vector.broadcast %cst_84 : f32 to vector<8x8xf32>
      %144 = arith.addf %138, %143 : vector<8x8xf32>
      %145 = vector.broadcast %142 : vector<8x1xf32> to vector<8x8xf32>
      %146 = arith.divf %144, %145 : vector<8x8xf32>
      %cst_85 = arith.constant dense<0.000000e+00> : vector<8x8xf32>
      %147 = tpu.matmul %146, %127, %cst_85 {dimension_numbers = #tpu.dot_dimension_numbers<[1], [0], [0], [1], [0, 0, 1, 1], [], []>} : vector<8x8xf32>, vector<8x8xf32>, vector<8x8xf32> -> vector<8x8xf32>
      %c0_86 = arith.constant 0 : index
      %c0_87 = arith.constant 0 : index
      %c0_88 = arith.constant 0 : index
      %148 = vector.load %arg7[%c0_86, %c0_87, %c0_88] : memref<1x8x32xf32, #tpu.memory_space<vmem>>, vector<1x8x32xf32>
      %149 = vector.shape_cast %148 : vector<1x8x32xf32> to vector<8x32xf32>
      %150 = arith.index_cast %c1_i32_73 : i32 to index
      %c0_89 = arith.constant 0 : index
      %c0_90 = arith.constant 0 : index
      %151 = vector.load %arg5[%150, %c0_89, %c0_90] : memref<4x8x32xf32, #tpu.memory_space<vmem>>, vector<1x8x32xf32>
      %152 = vector.shape_cast %151 : vector<1x8x32xf32> to vector<8x32xf32>
      %cst_91 = arith.constant dense<0.000000e+00> : vector<8x32xf32>
      %153 = tpu.matmul %147, %152, %cst_91 {dimension_numbers = #tpu.dot_dimension_numbers<[1], [0], [0], [1], [0, 0, 1, 1], [], []>} : vector<8x8xf32>, vector<8x32xf32>, vector<8x32xf32> -> vector<8x32xf32>
      %154 = arith.addf %149, %153 : vector<8x32xf32>
      %c0_92 = arith.constant 0 : index
      %c0_93 = arith.constant 0 : index
      %c0_94 = arith.constant 0 : index
      %155 = vector.load %arg7[%c0_92, %c0_93, %c0_94] : memref<1x8x32xf32, #tpu.memory_space<vmem>>, vector<1x8x32xf32>
      %156 = vector.shape_cast %155 : vector<1x8x32xf32> to vector<8x32xf32>
      %157 = vector.shape_cast %154 : vector<8x32xf32> to vector<1x8x32xf32>
      tpu.vector_store %arg7[%c0_92, %c0_93, %c0_94], %157 {strides = array<i32>} : memref<1x8x32xf32, #tpu.memory_space<vmem>>, vector<1x8x32xf32>,
      %c2_i32_95 = arith.constant 2 : i32
      %158 = arith.index_cast %c2_i32_95 : i32 to index
      %c0_96 = arith.constant 0 : index
      %c0_97 = arith.constant 0 : index
      %159 = vector.load %arg4[%158, %c0_96, %c0_97] : memref<4x32x24xf32, #tpu.memory_space<vmem>>, vector<1x32x24xf32>
      %160 = vector.shape_cast %159 : vector<1x32x24xf32> to vector<32x24xf32>
      %cst_98 = arith.constant dense<0.000000e+00> : vector<8x24xf32>
      %161 = tpu.matmul %74, %160, %cst_98 {dimension_numbers = #tpu.dot_dimension_numbers<[1], [0], [0], [1], [0, 0, 1, 1], [], []>} : vector<8x32xf32>, vector<32x24xf32>, vector<8x24xf32> -> vector<8x24xf32>
      %162 = vector.extract_strided_slice %161 {offsets = [0, 0], sizes = [8, 8], strides = [1, 1]} : vector<8x24xf32> to vector<8x8xf32>
      %163 = vector.extract_strided_slice %161 {offsets = [0, 8], sizes = [8, 8], strides = [1, 1]} : vector<8x24xf32> to vector<8x8xf32>
      %164 = vector.extract_strided_slice %161 {offsets = [0, 16], sizes = [8, 8], strides = [1, 1]} : vector<8x24xf32> to vector<8x8xf32>
      %cst_99 = arith.constant dense<0.000000e+00> : vector<8x8xf32>
      %165 = tpu.matmul %162, %163, %cst_99 {dimension_numbers = #tpu.dot_dimension_numbers<[1], [1], [0], [0], [0, 0, 1, 0], [], []>} : vector<8x8xf32>, vector<8x8xf32>, vector<8x8xf32> -> vector<8x8xf32>
      %166 = arith.index_cast %c2_i32_95 : i32 to index
      %c0_100 = arith.constant 0 : index
      %c0_101 = arith.constant 0 : index
      %167 = vector.load %arg9[%166, %c0_100, %c0_101] : memref<4x8x8xf32, #tpu.memory_space<vmem>>, vector<1x8x8xf32>
      %168 = vector.shape_cast %167 : vector<1x8x8xf32> to vector<8x8xf32>
      %169 = vector.shape_cast %165 : vector<8x8xf32> to vector<1x8x8xf32>
      tpu.vector_store %arg9[%166, %c0_100, %c0_101], %169 {strides = array<i32>} : memref<4x8x8xf32, #tpu.memory_space<vmem>>, vector<1x8x8xf32>,
      %170 = arith.mulf %165, %77 : vector<8x8xf32>
      %cst_102 = arith.constant 0.000000e+00 : f32
      %171 = vector.broadcast %cst_102 : f32 to vector<8x8xf32>
      %172 = arith.cmpf oeq, %170, %171 : vector<8x8xf32>
      %cst_103 = arith.constant -1.000000e+09 : f32
      %173 = vector.broadcast %cst_103 : f32 to vector<8x8xf32>
      %174 = arith.select %172, %173, %170 : vector<8x8xi1>, vector<8x8xf32>
      %175 = math.exp %174 : vector<8x8xf32>
      %cst_104 = arith.constant dense<0.000000e+00> : vector<8xf32>
      %176 = vector.multi_reduction <add>, %175, %cst_104 [1] : vector<8x8xf32> to vector<8xf32>
      %177 = vector.shape_cast %176 : vector<8xf32> to vector<8x1xf32>
      %cst_105 = arith.constant 9.99999997E-7 : f32
      %178 = vector.broadcast %cst_105 : f32 to vector<8x1xf32>
      %179 = arith.addf %177, %178 : vector<8x1xf32>
      %cst_106 = arith.constant 1.250000e-07 : f32
      %180 = vector.broadcast %cst_106 : f32 to vector<8x8xf32>
      %181 = arith.addf %175, %180 : vector<8x8xf32>
      %182 = vector.broadcast %179 : vector<8x1xf32> to vector<8x8xf32>
      %183 = arith.divf %181, %182 : vector<8x8xf32>
      %cst_107 = arith.constant dense<0.000000e+00> : vector<8x8xf32>
      %184 = tpu.matmul %183, %164, %cst_107 {dimension_numbers = #tpu.dot_dimension_numbers<[1], [0], [0], [1], [0, 0, 1, 1], [], []>} : vector<8x8xf32>, vector<8x8xf32>, vector<8x8xf32> -> vector<8x8xf32>
      %c0_108 = arith.constant 0 : index
      %c0_109 = arith.constant 0 : index
      %c0_110 = arith.constant 0 : index
      %185 = vector.load %arg7[%c0_108, %c0_109, %c0_110] : memref<1x8x32xf32, #tpu.memory_space<vmem>>, vector<1x8x32xf32>
      %186 = vector.shape_cast %185 : vector<1x8x32xf32> to vector<8x32xf32>
      %187 = arith.index_cast %c2_i32_95 : i32 to index
      %c0_111 = arith.constant 0 : index
      %c0_112 = arith.constant 0 : index
      %188 = vector.load %arg5[%187, %c0_111, %c0_112] : memref<4x8x32xf32, #tpu.memory_space<vmem>>, vector<1x8x32xf32>
      %189 = vector.shape_cast %188 : vector<1x8x32xf32> to vector<8x32xf32>
      %cst_113 = arith.constant dense<0.000000e+00> : vector<8x32xf32>
      %190 = tpu.matmul %184, %189, %cst_113 {dimension_numbers = #tpu.dot_dimension_numbers<[1], [0], [0], [1], [0, 0, 1, 1], [], []>} : vector<8x8xf32>, vector<8x32xf32>, vector<8x32xf32> -> vector<8x32xf32>
      %191 = arith.addf %186, %190 : vector<8x32xf32>
      %c0_114 = arith.constant 0 : index
      %c0_115 = arith.constant 0 : index
      %c0_116 = arith.constant 0 : index
      %192 = vector.load %arg7[%c0_114, %c0_115, %c0_116] : memref<1x8x32xf32, #tpu.memory_space<vmem>>, vector<1x8x32xf32>
      %193 = vector.shape_cast %192 : vector<1x8x32xf32> to vector<8x32xf32>
      %194 = vector.shape_cast %191 : vector<8x32xf32> to vector<1x8x32xf32>
      tpu.vector_store %arg7[%c0_114, %c0_115, %c0_116], %194 {strides = array<i32>} : memref<1x8x32xf32, #tpu.memory_space<vmem>>, vector<1x8x32xf32>,
      %c3_i32_117 = arith.constant 3 : i32
      %195 = arith.index_cast %c3_i32_117 : i32 to index
      %c0_118 = arith.constant 0 : index
      %c0_119 = arith.constant 0 : index
      %196 = vector.load %arg4[%195, %c0_118, %c0_119] : memref<4x32x24xf32, #tpu.memory_space<vmem>>, vector<1x32x24xf32>
      %197 = vector.shape_cast %196 : vector<1x32x24xf32> to vector<32x24xf32>
      %cst_120 = arith.constant dense<0.000000e+00> : vector<8x24xf32>
      %198 = tpu.matmul %74, %197, %cst_120 {dimension_numbers = #tpu.dot_dimension_numbers<[1], [0], [0], [1], [0, 0, 1, 1], [], []>} : vector<8x32xf32>, vector<32x24xf32>, vector<8x24xf32> -> vector<8x24xf32>
      %199 = vector.extract_strided_slice %198 {offsets = [0, 0], sizes = [8, 8], strides = [1, 1]} : vector<8x24xf32> to vector<8x8xf32>
      %200 = vector.extract_strided_slice %198 {offsets = [0, 8], sizes = [8, 8], strides = [1, 1]} : vector<8x24xf32> to vector<8x8xf32>
      %201 = vector.extract_strided_slice %198 {offsets = [0, 16], sizes = [8, 8], strides = [1, 1]} : vector<8x24xf32> to vector<8x8xf32>
      %cst_121 = arith.constant dense<0.000000e+00> : vector<8x8xf32>
      %202 = tpu.matmul %199, %200, %cst_121 {dimension_numbers = #tpu.dot_dimension_numbers<[1], [1], [0], [0], [0, 0, 1, 0], [], []>} : vector<8x8xf32>, vector<8x8xf32>, vector<8x8xf32> -> vector<8x8xf32>
      %203 = arith.index_cast %c3_i32_117 : i32 to index
      %c0_122 = arith.constant 0 : index
      %c0_123 = arith.constant 0 : index
      %204 = vector.load %arg9[%203, %c0_122, %c0_123] : memref<4x8x8xf32, #tpu.memory_space<vmem>>, vector<1x8x8xf32>
      %205 = vector.shape_cast %204 : vector<1x8x8xf32> to vector<8x8xf32>
      %206 = vector.shape_cast %202 : vector<8x8xf32> to vector<1x8x8xf32>
      tpu.vector_store %arg9[%203, %c0_122, %c0_123], %206 {strides = array<i32>} : memref<4x8x8xf32, #tpu.memory_space<vmem>>, vector<1x8x8xf32>,
      %207 = arith.mulf %202, %77 : vector<8x8xf32>
      %cst_124 = arith.constant 0.000000e+00 : f32
      %208 = vector.broadcast %cst_124 : f32 to vector<8x8xf32>
      %209 = arith.cmpf oeq, %207, %208 : vector<8x8xf32>
      %cst_125 = arith.constant -1.000000e+09 : f32
      %210 = vector.broadcast %cst_125 : f32 to vector<8x8xf32>
      %211 = arith.select %209, %210, %207 : vector<8x8xi1>, vector<8x8xf32>
      %212 = math.exp %211 : vector<8x8xf32>
      %cst_126 = arith.constant dense<0.000000e+00> : vector<8xf32>
      %213 = vector.multi_reduction <add>, %212, %cst_126 [1] : vector<8x8xf32> to vector<8xf32>
      %214 = vector.shape_cast %213 : vector<8xf32> to vector<8x1xf32>
      %cst_127 = arith.constant 9.99999997E-7 : f32
      %215 = vector.broadcast %cst_127 : f32 to vector<8x1xf32>
      %216 = arith.addf %214, %215 : vector<8x1xf32>
      %cst_128 = arith.constant 1.250000e-07 : f32
      %217 = vector.broadcast %cst_128 : f32 to vector<8x8xf32>
      %218 = arith.addf %212, %217 : vector<8x8xf32>
      %219 = vector.broadcast %216 : vector<8x1xf32> to vector<8x8xf32>
      %220 = arith.divf %218, %219 : vector<8x8xf32>
      %cst_129 = arith.constant dense<0.000000e+00> : vector<8x8xf32>
      %221 = tpu.matmul %220, %201, %cst_129 {dimension_numbers = #tpu.dot_dimension_numbers<[1], [0], [0], [1], [0, 0, 1, 1], [], []>} : vector<8x8xf32>, vector<8x8xf32>, vector<8x8xf32> -> vector<8x8xf32>
      %c0_130 = arith.constant 0 : index
      %c0_131 = arith.constant 0 : index
      %c0_132 = arith.constant 0 : index
      %222 = vector.load %arg7[%c0_130, %c0_131, %c0_132] : memref<1x8x32xf32, #tpu.memory_space<vmem>>, vector<1x8x32xf32>
      %223 = vector.shape_cast %222 : vector<1x8x32xf32> to vector<8x32xf32>
      %224 = arith.index_cast %c3_i32_117 : i32 to index
      %c0_133 = arith.constant 0 : index
      %c0_134 = arith.constant 0 : index
      %225 = vector.load %arg5[%224, %c0_133, %c0_134] : memref<4x8x32xf32, #tpu.memory_space<vmem>>, vector<1x8x32xf32>
      %226 = vector.shape_cast %225 : vector<1x8x32xf32> to vector<8x32xf32>
      %cst_135 = arith.constant dense<0.000000e+00> : vector<8x32xf32>
      %227 = tpu.matmul %221, %226, %cst_135 {dimension_numbers = #tpu.dot_dimension_numbers<[1], [0], [0], [1], [0, 0, 1, 1], [], []>} : vector<8x8xf32>, vector<8x32xf32>, vector<8x32xf32> -> vector<8x32xf32>
      %228 = arith.addf %223, %227 : vector<8x32xf32>
      %c0_136 = arith.constant 0 : index
      %c0_137 = arith.constant 0 : index
      %c0_138 = arith.constant 0 : index
      %229 = vector.load %arg7[%c0_136, %c0_137, %c0_138] : memref<1x8x32xf32, #tpu.memory_space<vmem>>, vector<1x8x32xf32>
      %230 = vector.shape_cast %229 : vector<1x8x32xf32> to vector<8x32xf32>
      %231 = vector.shape_cast %228 : vector<8x32xf32> to vector<1x8x32xf32>
      tpu.vector_store %arg7[%c0_136, %c0_137, %c0_138], %231 {strides = array<i32>} : memref<1x8x32xf32, #tpu.memory_space<vmem>>, vector<1x8x32xf32>,
      %c4_i32_139 = arith.constant 4 : i32
    } else {
    }
    %c0 = arith.constant 0 : index
    %c0_1 = arith.constant 0 : index
    %c0_2 = arith.constant 0 : index
    %3 = vector.load %arg3[%c0, %c0_1, %c0_2] : memref<1x8x4xf32, #tpu.memory_space<vmem>>, vector<1x8x4xf32>
    %4 = vector.shape_cast %3 : vector<1x8x4xf32> to vector<8x4xf32>
    %c4_i32 = arith.constant 4 : i32
    %5 = arith.muli %arg1, %c4_i32 : i32
    %c0_i32_3 = arith.constant 0 : i32
    %6 = arith.addi %5, %c0_i32_3 : i32
    %7 = tpu.iota {dimensions = array<i32: 1>} : vector<1x4xi32>
    %8 = vector.broadcast %6 : i32 to vector<1x4xi32>
    %9 = arith.cmpi eq, %7, %8 : vector<1x4xi32>
    %10 = arith.extui %9 : vector<1x4xi1> to vector<1x4xi32>
    %11 = arith.sitofp %10 : vector<1x4xi32> to vector<1x4xf32>
    %12 = vector.broadcast %11 : vector<1x4xf32> to vector<8x4xf32>
    %13 = arith.mulf %4, %12 : vector<8x4xf32>
    %cst = arith.constant dense<0.000000e+00> : vector<8x8xf32>
    %14 = tpu.matmul %13, %4, %cst {dimension_numbers = #tpu.dot_dimension_numbers<[1], [1], [0], [0], [0, 0, 1, 0], [], []>} : vector<8x4xf32>, vector<8x4xf32>, vector<8x8xf32> -> vector<8x8xf32>
    %c0_4 = arith.constant 0 : index
    %c0_5 = arith.constant 0 : index
    %c0_6 = arith.constant 0 : index
    %15 = vector.load %arg9[%c0_4, %c0_5, %c0_6] : memref<4x8x8xf32, #tpu.memory_space<vmem>>, vector<4x8x8xf32>
    %16 = vector.shape_cast %14 : vector<8x8xf32> to vector<1x8x8xf32>
    %17 = vector.broadcast %16 : vector<1x8x8xf32> to vector<4x8x8xf32>
    %18 = arith.mulf %15, %17 : vector<4x8x8xf32>
    %c0_7 = arith.constant 0 : index
    %c0_8 = arith.constant 0 : index
    %c0_9 = arith.constant 0 : index
    %c0_10 = arith.constant 0 : index
    %c0_11 = arith.constant 0 : index
    %19 = vector.load %arg8[%c0_7, %c0_8, %c0_9, %c0_10, %c0_11] : memref<1x4x4x8x8xf32, #tpu.memory_space<vmem>>, vector<1x1x4x8x8xf32>
    %20 = vector.shape_cast %19 : vector<1x1x4x8x8xf32> to vector<4x8x8xf32>
    %21 = vector.shape_cast %18 : vector<4x8x8xf32> to vector<1x1x4x8x8xf32>
    tpu.vector_store %arg8[%c0_7, %c0_8, %c0_9, %c0_10, %c0_11], %21 {strides = array<i32>} : memref<1x4x4x8x8xf32, #tpu.memory_space<vmem>>, vector<1x1x4x8x8xf32>,
    %c4_i32_12 = arith.constant 4 : i32
    %22 = arith.muli %arg1, %c4_i32_12 : i32
    %c1_i32 = arith.constant 1 : i32
    %23 = arith.addi %22, %c1_i32 : i32
    %24 = tpu.iota {dimensions = array<i32: 1>} : vector<1x4xi32>
    %25 = vector.broadcast %23 : i32 to vector<1x4xi32>
    %26 = arith.cmpi eq, %24, %25 : vector<1x4xi32>
    %27 = arith.extui %26 : vector<1x4xi1> to vector<1x4xi32>
    %28 = arith.sitofp %27 : vector<1x4xi32> to vector<1x4xf32>
    %29 = vector.broadcast %28 : vector<1x4xf32> to vector<8x4xf32>
    %30 = arith.mulf %4, %29 : vector<8x4xf32>
    %cst_13 = arith.constant dense<0.000000e+00> : vector<8x8xf32>
    %31 = tpu.matmul %30, %4, %cst_13 {dimension_numbers = #tpu.dot_dimension_numbers<[1], [1], [0], [0], [0, 0, 1, 0], [], []>} : vector<8x4xf32>, vector<8x4xf32>, vector<8x8xf32> -> vector<8x8xf32>
    %c0_14 = arith.constant 0 : index
    %c0_15 = arith.constant 0 : index
    %c0_16 = arith.constant 0 : index
    %32 = vector.load %arg9[%c0_14, %c0_15, %c0_16] : memref<4x8x8xf32, #tpu.memory_space<vmem>>, vector<4x8x8xf32>
    %33 = vector.shape_cast %31 : vector<8x8xf32> to vector<1x8x8xf32>
    %34 = vector.broadcast %33 : vector<1x8x8xf32> to vector<4x8x8xf32>
    %35 = arith.mulf %32, %34 : vector<4x8x8xf32>
    %c0_17 = arith.constant 0 : index
    %c1 = arith.constant 1 : index
    %c0_18 = arith.constant 0 : index
    %c0_19 = arith.constant 0 : index
    %c0_20 = arith.constant 0 : index
    %36 = vector.load %arg8[%c0_17, %c1, %c0_18, %c0_19, %c0_20] : memref<1x4x4x8x8xf32, #tpu.memory_space<vmem>>, vector<1x1x4x8x8xf32>
    %37 = vector.shape_cast %36 : vector<1x1x4x8x8xf32> to vector<4x8x8xf32>
    %38 = vector.shape_cast %35 : vector<4x8x8xf32> to vector<1x1x4x8x8xf32>
    tpu.vector_store %arg8[%c0_17, %c1, %c0_18, %c0_19, %c0_20], %38 {strides = array<i32>} : memref<1x4x4x8x8xf32, #tpu.memory_space<vmem>>, vector<1x1x4x8x8xf32>,
    %c4_i32_21 = arith.constant 4 : i32
    %39 = arith.muli %arg1, %c4_i32_21 : i32
    %c2_i32 = arith.constant 2 : i32
    %40 = arith.addi %39, %c2_i32 : i32
    %41 = tpu.iota {dimensions = array<i32: 1>} : vector<1x4xi32>
    %42 = vector.broadcast %40 : i32 to vector<1x4xi32>
    %43 = arith.cmpi eq, %41, %42 : vector<1x4xi32>
    %44 = arith.extui %43 : vector<1x4xi1> to vector<1x4xi32>
    %45 = arith.sitofp %44 : vector<1x4xi32> to vector<1x4xf32>
    %46 = vector.broadcast %45 : vector<1x4xf32> to vector<8x4xf32>
    %47 = arith.mulf %4, %46 : vector<8x4xf32>
    %cst_22 = arith.constant dense<0.000000e+00> : vector<8x8xf32>
    %48 = tpu.matmul %47, %4, %cst_22 {dimension_numbers = #tpu.dot_dimension_numbers<[1], [1], [0], [0], [0, 0, 1, 0], [], []>} : vector<8x4xf32>, vector<8x4xf32>, vector<8x8xf32> -> vector<8x8xf32>
    %c0_23 = arith.constant 0 : index
    %c0_24 = arith.constant 0 : index
    %c0_25 = arith.constant 0 : index
    %49 = vector.load %arg9[%c0_23, %c0_24, %c0_25] : memref<4x8x8xf32, #tpu.memory_space<vmem>>, vector<4x8x8xf32>
    %50 = vector.shape_cast %48 : vector<8x8xf32> to vector<1x8x8xf32>
    %51 = vector.broadcast %50 : vector<1x8x8xf32> to vector<4x8x8xf32>
    %52 = arith.mulf %49, %51 : vector<4x8x8xf32>
    %c0_26 = arith.constant 0 : index
    %c2 = arith.constant 2 : index
    %c0_27 = arith.constant 0 : index
    %c0_28 = arith.constant 0 : index
    %c0_29 = arith.constant 0 : index
    %53 = vector.load %arg8[%c0_26, %c2, %c0_27, %c0_28, %c0_29] : memref<1x4x4x8x8xf32, #tpu.memory_space<vmem>>, vector<1x1x4x8x8xf32>
    %54 = vector.shape_cast %53 : vector<1x1x4x8x8xf32> to vector<4x8x8xf32>
    %55 = vector.shape_cast %52 : vector<4x8x8xf32> to vector<1x1x4x8x8xf32>
    tpu.vector_store %arg8[%c0_26, %c2, %c0_27, %c0_28, %c0_29], %55 {strides = array<i32>} : memref<1x4x4x8x8xf32, #tpu.memory_space<vmem>>, vector<1x1x4x8x8xf32>,
    %c4_i32_30 = arith.constant 4 : i32
    %56 = arith.muli %arg1, %c4_i32_30 : i32
    %c3_i32 = arith.constant 3 : i32
    %57 = arith.addi %56, %c3_i32 : i32
    %58 = tpu.iota {dimensions = array<i32: 1>} : vector<1x4xi32>
    %59 = vector.broadcast %57 : i32 to vector<1x4xi32>
    %60 = arith.cmpi eq, %58, %59 : vector<1x4xi32>
    %61 = arith.extui %60 : vector<1x4xi1> to vector<1x4xi32>
    %62 = arith.sitofp %61 : vector<1x4xi32> to vector<1x4xf32>
    %63 = vector.broadcast %62 : vector<1x4xf32> to vector<8x4xf32>
    %64 = arith.mulf %4, %63 : vector<8x4xf32>
    %cst_31 = arith.constant dense<0.000000e+00> : vector<8x8xf32>
    %65 = tpu.matmul %64, %4, %cst_31 {dimension_numbers = #tpu.dot_dimension_numbers<[1], [1], [0], [0], [0, 0, 1, 0], [], []>} : vector<8x4xf32>, vector<8x4xf32>, vector<8x8xf32> -> vector<8x8xf32>
    %c0_32 = arith.constant 0 : index
    %c0_33 = arith.constant 0 : index
    %c0_34 = arith.constant 0 : index
    %66 = vector.load %arg9[%c0_32, %c0_33, %c0_34] : memref<4x8x8xf32, #tpu.memory_space<vmem>>, vector<4x8x8xf32>
    %67 = vector.shape_cast %65 : vector<8x8xf32> to vector<1x8x8xf32>
    %68 = vector.broadcast %67 : vector<1x8x8xf32> to vector<4x8x8xf32>
    %69 = arith.mulf %66, %68 : vector<4x8x8xf32>
    %c0_35 = arith.constant 0 : index
    %c3 = arith.constant 3 : index
    %c0_36 = arith.constant 0 : index
    %c0_37 = arith.constant 0 : index
    %c0_38 = arith.constant 0 : index
    %70 = vector.load %arg8[%c0_35, %c3, %c0_36, %c0_37, %c0_38] : memref<1x4x4x8x8xf32, #tpu.memory_space<vmem>>, vector<1x1x4x8x8xf32>
    %71 = vector.shape_cast %70 : vector<1x1x4x8x8xf32> to vector<4x8x8xf32>
    %72 = vector.shape_cast %69 : vector<4x8x8xf32> to vector<1x1x4x8x8xf32>
    tpu.vector_store %arg8[%c0_35, %c3, %c0_36, %c0_37, %c0_38], %72 {strides = array<i32>} : memref<1x4x4x8x8xf32, #tpu.memory_space<vmem>>, vector<1x1x4x8x8xf32>,
    return
  }
  func.func @transform_0(%arg0: i32, %arg1: i32) -> (i32, i32, i32) {
    %c0_i32 = arith.constant 0 : i32
    %c0_i32_0 = arith.constant 0 : i32
    %c0_i32_1 = arith.constant 0 : i32
    return %arg0, %c0_i32, %c0_i32_0 : i32, i32, i32
  }
  func.func @transform_1(%arg0: i32, %arg1: i32) -> (i32, i32, i32) {
    %c0_i32 = arith.constant 0 : i32
    %c0_i32_0 = arith.constant 0 : i32
    %c0_i32_1 = arith.constant 0 : i32
    return %arg0, %c0_i32, %c0_i32_0 : i32, i32, i32
  }
  func.func @transform_2(%arg0: i32, %arg1: i32) -> (i32, i32, i32) {
    %c0_i32 = arith.constant 0 : i32
    %c0_i32_0 = arith.constant 0 : i32
    %c0_i32_1 = arith.constant 0 : i32
    %c0_i32_2 = arith.constant 0 : i32
    return %c0_i32, %c0_i32_0, %c0_i32_1 : i32, i32, i32
  }
  func.func @transform_3(%arg0: i32, %arg1: i32) -> (i32, i32, i32) {
    %c0_i32 = arith.constant 0 : i32
    %c0_i32_0 = arith.constant 0 : i32
    %c0_i32_1 = arith.constant 0 : i32
    %c0_i32_2 = arith.constant 0 : i32
    return %c0_i32, %c0_i32_0, %c0_i32_1 : i32, i32, i32
  }
  func.func @transform_4(%arg0: i32, %arg1: i32) -> (i32, i32) {
    %c0_i32 = arith.constant 0 : i32
    %c0_i32_0 = arith.constant 0 : i32
    %c0_i32_1 = arith.constant 0 : i32
    return %c0_i32, %c0_i32_0 : i32, i32
  }
  func.func @transform_5(%arg0: i32, %arg1: i32) -> (i32, i32, i32) {
    %c0_i32 = arith.constant 0 : i32
    %c0_i32_0 = arith.constant 0 : i32
    %c0_i32_1 = arith.constant 0 : i32
    return %arg0, %c0_i32, %c0_i32_0 : i32, i32, i32
  }
  func.func @transform_6(%arg0: i32, %arg1: i32) -> (i32, i32, i32, i32, i32) {
    %c0_i32 = arith.constant 0 : i32
    %c0_i32_0 = arith.constant 0 : i32
    %c0_i32_1 = arith.constant 0 : i32
    %c0_i32_2 = arith.constant 0 : i32
    return %arg0, %arg1, %c0_i32, %c0_i32_0, %c0_i32_1 : i32, i32, i32, i32, i32
  }
}

</mosaic_0001>

<llo_original>
// kernel: tpu_custom_call.1
$region0: #{tpu_custom_call.1}
  #allocation0 [shape = 'u32[]', space=smem, size = 0x4, offset = 0x4, fixed_abs, tag = 'smem constant byte address 0x4 - core index']
  #allocation1 [shape = 'u32[72,128]{1,0:T(1,128)}', space=vmem, size = 0x9000, scoped, tag = 'internal scratch']
  #allocation2 [shape = 'f32[4,8,8]{2,1,0:T(8,128)}', space=vmem, size = 0x4000, scoped, tag = 'scratch operand']
  %s0 = inlined_call_operand.vmem [shape: f32[2,8,32], index: 0, kind: input, shape index: {}]
  %s1 = inlined_call_operand.vmem [shape: f32[2,8,4], index: 1, kind: input, shape index: {}]
  %s2 = inlined_call_operand.vmem [shape: f32[4,32,24], index: 2, kind: input, shape index: {}]
  %s3 = inlined_call_operand.vmem [shape: f32[4,8,32], index: 3, kind: input, shape index: {}]
  %s4 = inlined_call_operand.vmem [shape: f32[1,32], index: 4, kind: input, shape index: {}]
  %s5 = inlined_call_operand.hbm [shape: f32[2,8,32], index: 5, kind: output, shape index: {0}]
  %s6 = inlined_call_operand.hbm [shape: f32[2,4,4,8,8], index: 6, kind: output, shape index: {1}]
  %7 = xla_tuple %s5, %s6
  %s8 = sld [smem:[#allocation0]]
  $region65: #{tpu_custom_call.1} parent=0
    _
  %s10 = ssub.s32 1, %s8
  %s11 = scalar_select 0, %s10, %s8
  $region1: #{tpu_custom_call.1} parent=0
    #allocation3 [shape = 'u8[8192]{0}', space=vmem, size = 0x2000, scoped, tag = 'output window, operand 0']
    #allocation4 [shape = 's32[2]{0}', space=sflag, size = 0x8, scoped, tag = 'scoped memory for tpu_custom_call.1']
    #allocation5 [shape = 'u8[131072]{0}', space=vmem, size = 0x20000, scoped, tag = 'output window, operand 1']
    #allocation6 [shape = 's32[2]{0}', space=sflag, size = 0x8, scoped, tag = 'scoped memory for tpu_custom_call.1']
    %12 = vsyncpa [#allocation4], 0
    %s13 = scalar_lea.sflag [#allocation4], 1
    %14 = vsyncpa %s13, 0
    %15 = vsyncpa [#allocation6], 0
    %s16 = scalar_lea.sflag [#allocation6], 1
    %17 = vsyncpa %s16, 0
    loop: start=0, step=1, limit=4
    $region2: #{tpu_custom_call.1} parent=1 // loop_pre_header
      _
    $region3: #{tpu_custom_call.1} parent=1 // loop_header
      %s19 = sphi 0, %s23
      %p20 = scmp.ge.s32.totalorder %s19, 4
      %s26 = sphi 0, %s38
      %s27 = sphi 0, %s34
      %s28 = sphi 0, %s26
      %s29 = sphi 0, %s27
      %s30 = sphi 0, %s28
      %s31 = sphi 0, %s29
      %s41 = sphi 0, %s43
      %s44 = sphi 0, %s41
      %s45 = sphi 0, %s44
      %s61 = sphi 0, %s45
      %s67 = sphi 0, %s69
      %s70 = sphi 0, %s67
      %s71 = sphi 0, %s70
      %s87 = sphi 0, %s71
      %s91 = sphi 0, %s91
      %s93 = sphi 0, %s91
      %s94 = sphi 0, %s93
      %s108 = sphi 0, %s94
      %s112 = sphi 0, %s112
      %s114 = sphi 0, %s112
      %s115 = sphi 0, %s114
      %s129 = sphi 0, %s115
      %s133 = sphi 0, %s133
      %s135 = sphi 0, %s133
      %s136 = sphi 0, %s135
      %s150 = sphi 0, %s136
      %s156 = sphi 0, %s158
      %s159 = sphi 0, %s156
      %s160 = sphi 0, %s159
      %s176 = sphi 0, %s160
      %s184 = sphi 0, %s186
      %s187 = sphi 0, %s184
      %s188 = sphi 0, %s187
      %s204 = sphi 0, %s188
    $region4: #{tpu_custom_call.1} parent=1 // loop_header_branch
      %22 = sbr.rel (%p20) target = $region8
    $region5: #{tpu_custom_call.1} parent=1 // loop_body
      %s24 = ssub.s32 %s19, 1
      %s25 = ssub.s32 %s19, 2
      %s32 = sadd.s32 1, %s27
      %p33 = scmp.ge.s32.totalorder %s32, 1
      %s34 = scalar_select %p33, 0, %s32
      %s35 = sadd.s32 1, %s26
      %s36 = scalar_select %p33, %s35, %s26
      %p37 = scmp.ge.s32.totalorder %s36, 2
      %s38 = scalar_select %p37, 0, %s36
      %s39 = ssub.s32 %s26, %s38
      %p40 = scmp.eq.s32.totalorder %s39, 0
      %s42 = sadd.s32 %s41, 1
      %s43 = scalar_select %p40, %s41, %s42
      %p46 = pneg %p40
      %p47 = scmp.eq.s32.totalorder %s19, 1
      %p48 = por %p46, %p47
      %p49 = scmp.ne.s32.totalorder %s41, %s44
      %p50 = scmp.eq.s32.totalorder %s19, 0
      %p51 = por %p49, %p50
      %p52 = scmp.ne.s32.totalorder %s41, %s44
      %p53 = scmp.eq.s32.totalorder %s24, 1
      %p54 = por %p52, %p53
      %p55 = scmp.ne.s32.totalorder %s44, %s45
      %p56 = scmp.eq.s32.totalorder %s24, 0
      %p57 = por %p55, %p56
      %p58 = scmp.ne.s32.totalorder %s44, %s45
      %p59 = scmp.eq.s32.totalorder %s25, 1
      %p60 = por %p58, %p59
      %p62 = scmp.ne.s32.totalorder %s45, %s61
      %p63 = scmp.eq.s32.totalorder %s25, 0
      %p64 = por %p62, %p63
      %s65 = ssub.s32 %s26, %s38
      %p66 = scmp.eq.s32.totalorder %s65, 0
      %s68 = sadd.s32 %s67, 1
      %s69 = scalar_select %p66, %s67, %s68
      %p72 = pneg %p66
      %p73 = scmp.eq.s32.totalorder %s19, 1
      %p74 = por %p72, %p73
      %p75 = scmp.ne.s32.totalorder %s67, %s70
      %p76 = scmp.eq.s32.totalorder %s19, 0
      %p77 = por %p75, %p76
      %p78 = scmp.ne.s32.totalorder %s67, %s70
      %p79 = scmp.eq.s32.totalorder %s24, 1
      %p80 = por %p78, %p79
      %p81 = scmp.ne.s32.totalorder %s70, %s71
      %p82 = scmp.eq.s32.totalorder %s24, 0
      %p83 = por %p81, %p82
      %p84 = scmp.ne.s32.totalorder %s70, %s71
      %p85 = scmp.eq.s32.totalorder %s25, 1
      %p86 = por %p84, %p85
      %p88 = scmp.ne.s32.totalorder %s71, %s87
      %p89 = scmp.eq.s32.totalorder %s25, 0
      %p90 = por %p88, %p89
      %s92 = sadd.s32 %s91, 1
      %p95 = scmp.eq.s32.totalorder %s19, 1
      %p96 = scmp.ne.s32.totalorder %s91, %s93
      %p97 = scmp.eq.s32.totalorder %s19, 0
      %p98 = por %p96, %p97
      %p99 = scmp.ne.s32.totalorder %s91, %s93
      %p100 = scmp.eq.s32.totalorder %s24, 1
      %p101 = por %p99, %p100
      %p102 = scmp.ne.s32.totalorder %s93, %s94
      %p103 = scmp.eq.s32.totalorder %s24, 0
      %p104 = por %p102, %p103
      %p105 = scmp.ne.s32.totalorder %s93, %s94
      %p106 = scmp.eq.s32.totalorder %s25, 1
      %p107 = por %p105, %p106
      %p109 = scmp.ne.s32.totalorder %s94, %s108
      %p110 = scmp.eq.s32.totalorder %s25, 0
      %p111 = por %p109, %p110
      %s113 = sadd.s32 %s112, 1
      %p116 = scmp.eq.s32.totalorder %s19, 1
      %p117 = scmp.ne.s32.totalorder %s112, %s114
      %p118 = scmp.eq.s32.totalorder %s19, 0
      %p119 = por %p117, %p118
      %p120 = scmp.ne.s32.totalorder %s112, %s114
      %p121 = scmp.eq.s32.totalorder %s24, 1
      %p122 = por %p120, %p121
      %p123 = scmp.ne.s32.totalorder %s114, %s115
      %p124 = scmp.eq.s32.totalorder %s24, 0
      %p125 = por %p123, %p124
      %p126 = scmp.ne.s32.totalorder %s114, %s115
      %p127 = scmp.eq.s32.totalorder %s25, 1
      %p128 = por %p126, %p127
      %p130 = scmp.ne.s32.totalorder %s115, %s129
      %p131 = scmp.eq.s32.totalorder %s25, 0
      %p132 = por %p130, %p131
      %s134 = sadd.s32 %s133, 1
      %p137 = scmp.eq.s32.totalorder %s19, 1
      %p138 = scmp.ne.s32.totalorder %s133, %s135
      %p139 = scmp.eq.s32.totalorder %s19, 0
      %p140 = por %p138, %p139
      %p141 = scmp.ne.s32.totalorder %s133, %s135
      %p142 = scmp.eq.s32.totalorder %s24, 1
      %p143 = por %p141, %p142
      %p144 = scmp.ne.s32.totalorder %s135, %s136
      %p145 = scmp.eq.s32.totalorder %s24, 0
      %p146 = por %p144, %p145
      %p147 = scmp.ne.s32.totalorder %s135, %s136
      %p148 = scmp.eq.s32.totalorder %s25, 1
      %p149 = por %p147, %p148
      %p151 = scmp.ne.s32.totalorder %s136, %s150
      %p152 = scmp.eq.s32.totalorder %s25, 0
      %p153 = por %p151, %p152
      %s154 = ssub.s32 %s26, %s38
      %p155 = scmp.eq.s32.totalorder %s154, 0
      %s157 = sadd.s32 %s156, 1
      %s158 = scalar_select %p155, %s156, %s157
      %p161 = pneg %p155
      %p162 = scmp.eq.s32.totalorder %s19, 1
      %p163 = por %p161, %p162
      %p164 = scmp.ne.s32.totalorder %s156, %s159
      %p165 = scmp.eq.s32.totalorder %s19, 0
      %p166 = por %p164, %p165
      %p167 = scmp.ne.s32.totalorder %s156, %s159
      %p168 = scmp.eq.s32.totalorder %s24, 1
      %p169 = por %p167, %p168
      %p170 = scmp.ne.s32.totalorder %s159, %s160
      %p171 = scmp.eq.s32.totalorder %s24, 0
      %p172 = por %p170, %p171
      %p173 = scmp.ne.s32.totalorder %s159, %s160
      %p174 = scmp.eq.s32.totalorder %s25, 1
      %p175 = por %p173, %p174
      %p177 = scmp.ne.s32.totalorder %s160, %s176
      %p178 = scmp.eq.s32.totalorder %s25, 0
      %p179 = por %p177, %p178
      %s180 = ssub.s32 %s26, %s38
      %s181 = ssub.s32 %s27, %s34
      %s182 = sor.u32 %s180, %s181
      %p183 = scmp.eq.s32.totalorder %s182, 0
      %s185 = sadd.s32 %s184, 1
      %s186 = scalar_select %p183, %s184, %s185
      %p189 = pneg %p183
      %p190 = scmp.eq.s32.totalorder %s19, 1
      %p191 = por %p189, %p190
      %p192 = scmp.ne.s32.totalorder %s184, %s187
      %p193 = scmp.eq.s32.totalorder %s19, 0
      %p194 = por %p192, %p193
      %p195 = scmp.ne.s32.totalorder %s184, %s187
      %p196 = scmp.eq.s32.totalorder %s24, 1
      %p197 = por %p195, %p196
      %p198 = scmp.ne.s32.totalorder %s187, %s188
      %p199 = scmp.eq.s32.totalorder %s24, 0
      %p200 = por %p198, %p199
      %p201 = scmp.ne.s32.totalorder %s187, %s188
      %p202 = scmp.eq.s32.totalorder %s25, 1
      %p203 = por %p201, %p202
      %p205 = scmp.ne.s32.totalorder %s188, %s204
      %p206 = scmp.eq.s32.totalorder %s25, 0
      %p207 = por %p205, %p206
      %p208 = scmp.le.s32.totalorder 1, %s19
      %p209 = scmp.lt.s32.totalorder %s19, 3
      %p210 = pnand %p208, %p209
      %p211 = pneg %p210
      // Predicated region
      $region9: #{tpu_custom_call.1} parent=5 // pred_check
        _
      $region10: #{tpu_custom_call.1} parent=5 // pred_check_branch
        %213 = sbr.rel (%p210) target = $region12
      $region11: #{tpu_custom_call.1} parent=5 // pred_region
        %s214 = ssub.s32 %s19, 1
        // Predicated region
        $region13: #{tpu_custom_call.1} parent=11 // pred_check
          %p215 = pneg %p104
        $region14: #{tpu_custom_call.1} parent=11 // pred_check_branch
          %217 = sbr.rel (%p215) target = $region16
        $region15: #{tpu_custom_call.1} parent=11 // pred_region
          _
        $region16: #{tpu_custom_call.1} parent=11 // pred_fallthru
          _
        // Predicated region
        $region17: #{tpu_custom_call.1} parent=11 // pred_check
          %p218 = pneg %p125
        $region18: #{tpu_custom_call.1} parent=11 // pred_check_branch
          %220 = sbr.rel (%p218) target = $region20
        $region19: #{tpu_custom_call.1} parent=11 // pred_region
          _
        $region20: #{tpu_custom_call.1} parent=11 // pred_fallthru
          _
        // Predicated region
        $region21: #{tpu_custom_call.1} parent=11 // pred_check
          %p221 = pneg %p146
        $region22: #{tpu_custom_call.1} parent=11 // pred_check_branch
          %223 = sbr.rel (%p221) target = $region24
        $region23: #{tpu_custom_call.1} parent=11 // pred_region
          _
        $region24: #{tpu_custom_call.1} parent=11 // pred_fallthru
          _
      $region12: #{tpu_custom_call.1} parent=5 // pred_fallthru
        _
      %p224 = scmp.lt.s32.totalorder %s19, 2
      // Predicated region
      $region25: #{tpu_custom_call.1} parent=5 // pred_check
        %p225 = pneg %p224
      $region26: #{tpu_custom_call.1} parent=5 // pred_check_branch
        %227 = sbr.rel (%p225) target = $region28
      $region27: #{tpu_custom_call.1} parent=5 // pred_region
        // Predicated region
        $region29: #{tpu_custom_call.1} parent=27 // pred_check
          %p228 = pneg %p51
        $region30: #{tpu_custom_call.1} parent=27 // pred_check_branch
          %230 = sbr.rel (%p228) target = $region32
        $region31: #{tpu_custom_call.1} parent=27 // pred_region
          %p231 = scmp.lt.s32.totalorder %s26, 1
          %s232 = scalar_select %p231, %s26, 1
          %s233 = smul.addr %s232, 8
          %s234 = scalar_lea.vmem %s0, %s233
        $region32: #{tpu_custom_call.1} parent=27 // pred_fallthru
          _
        // Predicated region
        $region33: #{tpu_custom_call.1} parent=27 // pred_check
          %p235 = pneg %p77
        $region34: #{tpu_custom_call.1} parent=27 // pred_check_branch
          %237 = sbr.rel (%p235) target = $region36
        $region35: #{tpu_custom_call.1} parent=27 // pred_region
          %p238 = scmp.lt.s32.totalorder %s26, 1
          %s239 = scalar_select %p238, %s26, 1
          %s240 = smul.addr %s239, 8
          %s241 = scalar_lea.vmem %s1, %s240
        $region36: #{tpu_custom_call.1} parent=27 // pred_fallthru
          _
      $region28: #{tpu_custom_call.1} parent=5 // pred_fallthru
        _
      %p242 = scmp.le.s32.totalorder 1, %s19
      %p243 = scmp.lt.s32.totalorder %s19, 3
      %p244 = pnand %p242, %p243
      %p245 = pneg %p244
      // Predicated region
      $region37: #{tpu_custom_call.1} parent=5 // pred_check
        _
      $region38: #{tpu_custom_call.1} parent=5 // pred_check_branch
        %247 = sbr.rel (%p244) target = $region40
      $region39: #{tpu_custom_call.1} parent=5 // pred_region
        %s248 = ssub.s32 %s19, 1
        %p249 = scmp.lt.s32.totalorder %s28, 1
        %s250 = scalar_select %p249, %s28, 1
        %s251 = smul.addr %s250, 8
        %s252 = scalar_lea.vmem %s0, %s251
        %p253 = pneg %p57
        %p254 = pneg %p54
        %p255 = scmp.lt.s32.totalorder %s28, 1
        %s256 = scalar_select %p255, %s28, 1
        %s257 = smul.addr %s256, 8
        %s258 = scalar_lea.vmem %s1, %s257
        %p259 = pneg %p83
        %p260 = pneg %p80
        %p261 = pneg %p104
        %p262 = pneg %p101
        %p263 = pneg %p125
        %p264 = pneg %p122
        %p265 = pneg %p146
        %p266 = pneg %p143
        %p267 = pneg %p172
        %p268 = pneg %p169
        %s269 = sand.u32 %s159, 1
        %s270 = scalar_lea.sflag [#allocation4], %s269
        %s271 = sand.u32 %s159, 1
        %s272 = smul.addr %s271, 8
        %s273 = scalar_lea.vmem [#allocation3], %s272
        %p274 = pneg %p200
        %p275 = pneg %p197
        %s276 = sand.u32 %s187, 1
        %s277 = scalar_lea.sflag [#allocation6], %s276
        %s278 = sand.u32 %s187, 1
        %s279 = smul.addr %s278, 128
        %s280 = scalar_lea.vmem [#allocation5], %s279
        %p281 = scmp.lt.s32.totalorder %s28, 1
        %s282 = scalar_select %p281, %s28, 1
        %s283 = smul.addr %s282, 8
        %s284 = scalar_lea.vmem %s0, %s283
        %p285 = scmp.lt.s32.totalorder %s28, 1
        %s286 = scalar_select %p285, %s28, 1
        %s287 = smul.addr %s286, 8
        %s288 = scalar_lea.vmem %s1, %s287
        %s289 = smul.u32 4, %s29
        %p290 = scmp.eq.s32.totalorder %s29, 0
        // Predicated region
        $region41: #{tpu_custom_call.1} parent=39 // pred_check
          %p291 = pneg %p290
        $region42: #{tpu_custom_call.1} parent=39 // pred_check_branch
          %293 = sbr.rel (%p291) target = $region44
        $region43: #{tpu_custom_call.1} parent=39 // pred_region
          %v294 = vld [vmem:[%s284] sm:$0xff]
          %v295 = vld [vmem:[%s288] sm:$0xff]
          %vm296 = vcmask 31744
          %v298 = vsel %vm296, %v295, 0
          %300 = vmatpush.xpose.msra.mxu0 0.0
          %301 = vmatpush.xpose.msra.mxu0 0.0
          %302 = vmatpush.xpose.msra.mxu0 0.0
          %303 = vmatpush.xpose.msra.mxu0 0.0
          %304 = vmatpush.xpose.msra.mxu0 0.0
          %305 = vmatpush.xpose.msra.mxu0 0.0
          %306 = vmatpush.xpose.msra.mxu0 0.0
          %307 = vmatpush.xpose.msra.mxu0 0.0
          %308 = vmatpush.xpose.msra.mxu0 0.0
          %309 = vmatpush.xpose.msra.mxu0 0.0
          %310 = vmatpush.xpose.msra.mxu0 0.0
          %311 = vmatpush.xpose.msra.mxu0 0.0
          %312 = vmatpush.xpose.msra.mxu0 0.0
          %313 = vmatpush.xpose.msra.mxu0 0.0
          %314 = vmatpush.xpose.msra.mxu0 0.0
          %315 = vmatpush.xpose.msra.mxu0 %v298
          %316 = vmatmul.f32.gmra.mxu0 %v298
          %v317 = vpop.f32.mrf.mxu0
          %v318 = vadd.f32 0.0, %v317
          %319 = vdwg.mxu0
          %v320 = vld [vmem:[%s4] sm:$0x1]
          %v322 = vperm.slane %v320, 0
          %vm324 = vcmask 261120
          %325 = vst.msk [vmem:[%s273] sm:$0xff] %vm324, %v322
          %v326 = vld [vmem:[%s2] sm:$0xff]
          %v327 = vld [vmem:[%s2 + $0x8] sm:$0xff]
          %v328 = vld [vmem:[%s2 + $0x10] sm:$0xff]
          %v329 = vld [vmem:[%s2 + $0x18] sm:$0xff]
          %v331 = vsel %vm324, %v294, 0
          %333 = vmatpush.msra.mxu0 0.0
          %334 = vmatpush.msra.mxu0 0.0
          %335 = vmatpush.msra.mxu0 0.0
          %336 = vmatpush.msra.mxu0 0.0
          %337 = vmatpush.msra.mxu0 0.0
          %338 = vmatpush.msra.mxu0 0.0
          %339 = vmatpush.msra.mxu0 0.0
          %340 = vmatpush.msra.mxu0 0.0
          %341 = vmatpush.msra.mxu0 0.0
          %342 = vmatpush.msra.mxu0 0.0
          %343 = vmatpush.msra.mxu0 0.0
          %344 = vmatpush.msra.mxu0 0.0
          %345 = vmatpush.msra.mxu0 %v329
          %346 = vmatpush.msra.mxu0 %v328
          %347 = vmatpush.msra.mxu0 %v327
          %348 = vmatpush.msra.mxu0 %v326
          %349 = vmatmul.f32.gmra.mxu0 %v331
          %v350 = vpop.f32.mrf.mxu0
          %v351 = vadd.f32 0.0, %v350
          %352 = vdwg.mxu0
          %354 = vrot.lane.b32.xlu0 %v351, 120
          %v355 = vpop.permute.xlu0 %354
          %vm356 = vcmask 64512
          %v357 = vsel %vm356, %v351, 0
          %v359 = vsel %vm356, %v355, 0
          %361 = vmatpush.xpose.msra.mxu0 0.0
          %362 = vmatpush.xpose.msra.mxu0 0.0
          %363 = vmatpush.xpose.msra.mxu0 0.0
          %364 = vmatpush.xpose.msra.mxu0 0.0
          %365 = vmatpush.xpose.msra.mxu0 0.0
          %366 = vmatpush.xpose.msra.mxu0 0.0
          %367 = vmatpush.xpose.msra.mxu0 0.0
          %368 = vmatpush.xpose.msra.mxu0 0.0
          %369 = vmatpush.xpose.msra.mxu0 0.0
          %370 = vmatpush.xpose.msra.mxu0 0.0
          %371 = vmatpush.xpose.msra.mxu0 0.0
          %372 = vmatpush.xpose.msra.mxu0 0.0
          %373 = vmatpush.xpose.msra.mxu0 0.0
          %374 = vmatpush.xpose.msra.mxu0 0.0
          %375 = vmatpush.xpose.msra.mxu0 0.0
          %376 = vmatpush.xpose.msra.mxu0 %v359
          %377 = vmatmul.f32.gmra.mxu0 %v357
          %v378 = vpop.f32.mrf.mxu0
          %v379 = vadd.f32 0.0, %v378
          %380 = vdwg.mxu0
          %381 = vst.msk [vmem:[#allocation2] sm:$0xff] %vm356, %v379
          %v382 = vmul.f32 %v379, %v318
          %vm383 = vcmp.eq.f32.partialorder %v382, 0.0
          %v384 = vsel %vm383, -1e+09, %v382
          %v385 = vmul.f32 %v384, 1.442695
          %v386 = vpow.pop %v385
          %v387 = vsel %vm356, %v386, 0.0
          %388 = vadd.xlane.f32.xlu0 %v387
          %v389 = vpop.xlane.xlu0 %388
          %v390 = vadd.f32 %v389, 1e-06
          %v391 = vadd.f32 %v386, 1.25e-07
          %v392 = vrcp.pop %v390
          %v393 = vmul.f32 %v390, %v392
          %v394 = vsub.f32 1.0, %v393
          %v395 = vmul.f32 %v392, %v394
          %v396 = vadd.f32 %v392, %v395
          %vm397 = vweird.f32 %v390
          %vm398 = vweird.f32 %v392
          %vm399 = vmor %vm397, %vm398
          %v400 = vsel %vm399, %v392, %v396
          %v401 = vand.u32 2147483647, %v390
          %vm402 = vcmp.eq.f32.partialorder %v401, 8.507059e+37
          %v403 = vand.u32 %v390, 2147483648
          %v404 = vor.u32 1.1754944e-38, %v403
          %v405 = vsel %vm402, %v404, %v400
          %v406 = vmul.f32 %v391, %v405
          %407 = vrot.lane.b32.xlu0 %v351, 112
          %v408 = vpop.permute.xlu0 %407
          %v411 = vsel %vm356, %v406, 0
          %413 = vmatpush.msra.mxu0 0.0
          %414 = vmatpush.msra.mxu0 0.0
          %415 = vmatpush.msra.mxu0 0.0
          %416 = vmatpush.msra.mxu0 0.0
          %417 = vmatpush.msra.mxu0 0.0
          %418 = vmatpush.msra.mxu0 0.0
          %419 = vmatpush.msra.mxu0 0.0
          %420 = vmatpush.msra.mxu0 0.0
          %421 = vmatpush.msra.mxu0 0.0
          %422 = vmatpush.msra.mxu0 0.0
          %423 = vmatpush.msra.mxu0 0.0
          %424 = vmatpush.msra.mxu0 0.0
          %425 = vmatpush.msra.mxu0 0.0
          %426 = vmatpush.msra.mxu0 0.0
          %427 = vmatpush.msra.mxu0 0.0
          %428 = vmatpush.msra.mxu0 %v408
          %429 = vmatmul.f32.gmra.mxu0 %v411
          %v430 = vpop.f32.mrf.mxu0
          %v431 = vadd.f32 0.0, %v430
          %432 = vdwg.mxu0
          %v433 = vld [vmem:[%s273] sm:$0xff]
          %v434 = vld [vmem:[%s3] sm:$0xff]
          %v436 = vsel %vm356, %v431, 0
          %438 = vmatpush.msra.mxu0 0.0
          %439 = vmatpush.msra.mxu0 0.0
          %440 = vmatpush.msra.mxu0 0.0
          %441 = vmatpush.msra.mxu0 0.0
          %442 = vmatpush.msra.mxu0 0.0
          %443 = vmatpush.msra.mxu0 0.0
          %444 = vmatpush.msra.mxu0 0.0
          %445 = vmatpush.msra.mxu0 0.0
          %446 = vmatpush.msra.mxu0 0.0
          %447 = vmatpush.msra.mxu0 0.0
          %448 = vmatpush.msra.mxu0 0.0
          %449 = vmatpush.msra.mxu0 0.0
          %450 = vmatpush.msra.mxu0 0.0
          %451 = vmatpush.msra.mxu0 0.0
          %452 = vmatpush.msra.mxu0 0.0
          %453 = vmatpush.msra.mxu0 %v434
          %454 = vmatmul.f32.gmra.mxu0 %v436
          %v455 = vpop.f32.mrf.mxu0
          %v456 = vadd.f32 0.0, %v455
          %457 = vdwg.mxu0
          %v458 = vadd.f32 %v433, %v456
          %459 = vst.msk [vmem:[%s273] sm:$0xff] %vm324, %v458
          %s460 = scalar_lea.vmem %s2, 32
          %v461 = vld [vmem:[%s460] sm:$0xff]
          %v462 = vld [vmem:[%s460 + $0x8] sm:$0xff]
          %v463 = vld [vmem:[%s460 + $0x10] sm:$0xff]
          %v464 = vld [vmem:[%s460 + $0x18] sm:$0xff]
          %465 = vmatpush.msra.mxu0 0.0
          %466 = vmatpush.msra.mxu0 0.0
          %467 = vmatpush.msra.mxu0 0.0
          %468 = vmatpush.msra.mxu0 0.0
          %469 = vmatpush.msra.mxu0 0.0
          %470 = vmatpush.msra.mxu0 0.0
          %471 = vmatpush.msra.mxu0 0.0
          %472 = vmatpush.msra.mxu0 0.0
          %473 = vmatpush.msra.mxu0 0.0
          %474 = vmatpush.msra.mxu0 0.0
          %475 = vmatpush.msra.mxu0 0.0
          %476 = vmatpush.msra.mxu0 0.0
          %477 = vmatpush.msra.mxu0 %v464
          %478 = vmatpush.msra.mxu0 %v463
          %479 = vmatpush.msra.mxu0 %v462
          %480 = vmatpush.msra.mxu0 %v461
          %481 = vmatmul.f32.gmra.mxu0 %v331
          %v482 = vpop.f32.mrf.mxu0
          %v483 = vadd.f32 0.0, %v482
          %484 = vdwg.mxu0
          %486 = vrot.lane.b32.xlu0 %v483, 120
          %v487 = vpop.permute.xlu0 %486
          %v488 = vsel %vm356, %v483, 0
          %v490 = vsel %vm356, %v487, 0
          %492 = vmatpush.xpose.msra.mxu0 0.0
          %493 = vmatpush.xpose.msra.mxu0 0.0
          %494 = vmatpush.xpose.msra.mxu0 0.0
          %495 = vmatpush.xpose.msra.mxu0 0.0
          %496 = vmatpush.xpose.msra.mxu0 0.0
          %497 = vmatpush.xpose.msra.mxu0 0.0
          %498 = vmatpush.xpose.msra.mxu0 0.0
          %499 = vmatpush.xpose.msra.mxu0 0.0
          %500 = vmatpush.xpose.msra.mxu0 0.0
          %501 = vmatpush.xpose.msra.mxu0 0.0
          %502 = vmatpush.xpose.msra.mxu0 0.0
          %503 = vmatpush.xpose.msra.mxu0 0.0
          %504 = vmatpush.xpose.msra.mxu0 0.0
          %505 = vmatpush.xpose.msra.mxu0 0.0
          %506 = vmatpush.xpose.msra.mxu0 0.0
          %507 = vmatpush.xpose.msra.mxu0 %v490
          %508 = vmatmul.f32.gmra.mxu0 %v488
          %v509 = vpop.f32.mrf.mxu0
          %v510 = vadd.f32 0.0, %v509
          %511 = vdwg.mxu0
          %s512 = scalar_lea.vmem [#allocation2], 8
          %513 = vst.msk [vmem:[%s512] sm:$0xff] %vm356, %v510
          %v514 = vmul.f32 %v510, %v318
          %vm515 = vcmp.eq.f32.partialorder %v514, 0.0
          %v516 = vsel %vm515, -1e+09, %v514
          %v517 = vmul.f32 %v516, 1.442695
          %v518 = vpow.pop %v517
          %v519 = vsel %vm356, %v518, 0.0
          %520 = vadd.xlane.f32.xlu0 %v519
          %v521 = vpop.xlane.xlu0 %520
          %v522 = vadd.f32 %v521, 1e-06
          %v523 = vadd.f32 %v518, 1.25e-07
          %v524 = vrcp.pop %v522
          %v525 = vmul.f32 %v522, %v524
          %v526 = vsub.f32 1.0, %v525
          %v527 = vmul.f32 %v524, %v526
          %v528 = vadd.f32 %v524, %v527
          %vm529 = vweird.f32 %v522
          %vm530 = vweird.f32 %v524
          %vm531 = vmor %vm529, %vm530
          %v532 = vsel %vm531, %v524, %v528
          %v533 = vand.u32 2147483647, %v522
          %vm534 = vcmp.eq.f32.partialorder %v533, 8.507059e+37
          %v535 = vand.u32 %v522, 2147483648
          %v536 = vor.u32 1.1754944e-38, %v535
          %v537 = vsel %vm534, %v536, %v532
          %v538 = vmul.f32 %v523, %v537
          %539 = vrot.lane.b32.xlu0 %v483, 112
          %v540 = vpop.permute.xlu0 %539
          %v543 = vsel %vm356, %v538, 0
          %545 = vmatpush.msra.mxu0 0.0
          %546 = vmatpush.msra.mxu0 0.0
          %547 = vmatpush.msra.mxu0 0.0
          %548 = vmatpush.msra.mxu0 0.0
          %549 = vmatpush.msra.mxu0 0.0
          %550 = vmatpush.msra.mxu0 0.0
          %551 = vmatpush.msra.mxu0 0.0
          %552 = vmatpush.msra.mxu0 0.0
          %553 = vmatpush.msra.mxu0 0.0
          %554 = vmatpush.msra.mxu0 0.0
          %555 = vmatpush.msra.mxu0 0.0
          %556 = vmatpush.msra.mxu0 0.0
          %557 = vmatpush.msra.mxu0 0.0
          %558 = vmatpush.msra.mxu0 0.0
          %559 = vmatpush.msra.mxu0 0.0
          %560 = vmatpush.msra.mxu0 %v540
          %561 = vmatmul.f32.gmra.mxu0 %v543
          %v562 = vpop.f32.mrf.mxu0
          %v563 = vadd.f32 0.0, %v562
          %564 = vdwg.mxu0
          %v565 = vld [vmem:[%s273] sm:$0xff]
          %s566 = scalar_lea.vmem %s3, 8
          %v567 = vld [vmem:[%s566] sm:$0xff]
          %v569 = vsel %vm356, %v563, 0
          %571 = vmatpush.msra.mxu0 0.0
          %572 = vmatpush.msra.mxu0 0.0
          %573 = vmatpush.msra.mxu0 0.0
          %574 = vmatpush.msra.mxu0 0.0
          %575 = vmatpush.msra.mxu0 0.0
          %576 = vmatpush.msra.mxu0 0.0
          %577 = vmatpush.msra.mxu0 0.0
          %578 = vmatpush.msra.mxu0 0.0
          %579 = vmatpush.msra.mxu0 0.0
          %580 = vmatpush.msra.mxu0 0.0
          %581 = vmatpush.msra.mxu0 0.0
          %582 = vmatpush.msra.mxu0 0.0
          %583 = vmatpush.msra.mxu0 0.0
          %584 = vmatpush.msra.mxu0 0.0
          %585 = vmatpush.msra.mxu0 0.0
          %586 = vmatpush.msra.mxu0 %v567
          %587 = vmatmul.f32.gmra.mxu0 %v569
          %v588 = vpop.f32.mrf.mxu0
          %v589 = vadd.f32 0.0, %v588
          %590 = vdwg.mxu0
          %v591 = vadd.f32 %v565, %v589
          %592 = vst.msk [vmem:[%s273] sm:$0xff] %vm324, %v591
          %s593 = scalar_lea.vmem %s2, 64
          %v594 = vld [vmem:[%s593] sm:$0xff]
          %v595 = vld [vmem:[%s593 + $0x8] sm:$0xff]
          %v596 = vld [vmem:[%s593 + $0x10] sm:$0xff]
          %v597 = vld [vmem:[%s593 + $0x18] sm:$0xff]
          %598 = vmatpush.msra.mxu0 0.0
          %599 = vmatpush.msra.mxu0 0.0
          %600 = vmatpush.msra.mxu0 0.0
          %601 = vmatpush.msra.mxu0 0.0
          %602 = vmatpush.msra.mxu0 0.0
          %603 = vmatpush.msra.mxu0 0.0
          %604 = vmatpush.msra.mxu0 0.0
          %605 = vmatpush.msra.mxu0 0.0
          %606 = vmatpush.msra.mxu0 0.0
          %607 = vmatpush.msra.mxu0 0.0
          %608 = vmatpush.msra.mxu0 0.0
          %609 = vmatpush.msra.mxu0 0.0
          %610 = vmatpush.msra.mxu0 %v597
          %611 = vmatpush.msra.mxu0 %v596
          %612 = vmatpush.msra.mxu0 %v595
          %613 = vmatpush.msra.mxu0 %v594
          %614 = vmatmul.f32.gmra.mxu0 %v331
          %v615 = vpop.f32.mrf.mxu0
          %v616 = vadd.f32 0.0, %v615
          %617 = vdwg.mxu0
          %619 = vrot.lane.b32.xlu0 %v616, 120
          %v620 = vpop.permute.xlu0 %619
          %v621 = vsel %vm356, %v616, 0
          %v623 = vsel %vm356, %v620, 0
          %625 = vmatpush.xpose.msra.mxu0 0.0
          %626 = vmatpush.xpose.msra.mxu0 0.0
          %627 = vmatpush.xpose.msra.mxu0 0.0
          %628 = vmatpush.xpose.msra.mxu0 0.0
          %629 = vmatpush.xpose.msra.mxu0 0.0
          %630 = vmatpush.xpose.msra.mxu0 0.0
          %631 = vmatpush.xpose.msra.mxu0 0.0
          %632 = vmatpush.xpose.msra.mxu0 0.0
          %633 = vmatpush.xpose.msra.mxu0 0.0
          %634 = vmatpush.xpose.msra.mxu0 0.0
          %635 = vmatpush.xpose.msra.mxu0 0.0
          %636 = vmatpush.xpose.msra.mxu0 0.0
          %637 = vmatpush.xpose.msra.mxu0 0.0
          %638 = vmatpush.xpose.msra.mxu0 0.0
          %639 = vmatpush.xpose.msra.mxu0 0.0
          %640 = vmatpush.xpose.msra.mxu0 %v623
          %641 = vmatmul.f32.gmra.mxu0 %v621
          %v642 = vpop.f32.mrf.mxu0
          %v643 = vadd.f32 0.0, %v642
          %644 = vdwg.mxu0
          %s645 = scalar_lea.vmem [#allocation2], 16
          %646 = vst.msk [vmem:[%s645] sm:$0xff] %vm356, %v643
          %v647 = vmul.f32 %v643, %v318
          %vm648 = vcmp.eq.f32.partialorder %v647, 0.0
          %v649 = vsel %vm648, -1e+09, %v647
          %v650 = vmul.f32 %v649, 1.442695
          %v651 = vpow.pop %v650
          %v652 = vsel %vm356, %v651, 0.0
          %653 = vadd.xlane.f32.xlu0 %v652
          %v654 = vpop.xlane.xlu0 %653
          %v655 = vadd.f32 %v654, 1e-06
          %v656 = vadd.f32 %v651, 1.25e-07
          %v657 = vrcp.pop %v655
          %v658 = vmul.f32 %v655, %v657
          %v659 = vsub.f32 1.0, %v658
          %v660 = vmul.f32 %v657, %v659
          %v661 = vadd.f32 %v657, %v660
          %vm662 = vweird.f32 %v655
          %vm663 = vweird.f32 %v657
          %vm664 = vmor %vm662, %vm663
          %v665 = vsel %vm664, %v657, %v661
          %v666 = vand.u32 2147483647, %v655
          %vm667 = vcmp.eq.f32.partialorder %v666, 8.507059e+37
          %v668 = vand.u32 %v655, 2147483648
          %v669 = vor.u32 1.1754944e-38, %v668
          %v670 = vsel %vm667, %v669, %v665
          %v671 = vmul.f32 %v656, %v670
          %672 = vrot.lane.b32.xlu0 %v616, 112
          %v673 = vpop.permute.xlu0 %672
          %v676 = vsel %vm356, %v671, 0
          %678 = vmatpush.msra.mxu0 0.0
          %679 = vmatpush.msra.mxu0 0.0
          %680 = vmatpush.msra.mxu0 0.0
          %681 = vmatpush.msra.mxu0 0.0
          %682 = vmatpush.msra.mxu0 0.0
          %683 = vmatpush.msra.mxu0 0.0
          %684 = vmatpush.msra.mxu0 0.0
          %685 = vmatpush.msra.mxu0 0.0
          %686 = vmatpush.msra.mxu0 0.0
          %687 = vmatpush.msra.mxu0 0.0
          %688 = vmatpush.msra.mxu0 0.0
          %689 = vmatpush.msra.mxu0 0.0
          %690 = vmatpush.msra.mxu0 0.0
          %691 = vmatpush.msra.mxu0 0.0
          %692 = vmatpush.msra.mxu0 0.0
          %693 = vmatpush.msra.mxu0 %v673
          %694 = vmatmul.f32.gmra.mxu0 %v676
          %v695 = vpop.f32.mrf.mxu0
          %v696 = vadd.f32 0.0, %v695
          %697 = vdwg.mxu0
          %v698 = vld [vmem:[%s273] sm:$0xff]
          %s699 = scalar_lea.vmem %s3, 16
          %v700 = vld [vmem:[%s699] sm:$0xff]
          %v702 = vsel %vm356, %v696, 0
          %704 = vmatpush.msra.mxu0 0.0
          %705 = vmatpush.msra.mxu0 0.0
          %706 = vmatpush.msra.mxu0 0.0
          %707 = vmatpush.msra.mxu0 0.0
          %708 = vmatpush.msra.mxu0 0.0
          %709 = vmatpush.msra.mxu0 0.0
          %710 = vmatpush.msra.mxu0 0.0
          %711 = vmatpush.msra.mxu0 0.0
          %712 = vmatpush.msra.mxu0 0.0
          %713 = vmatpush.msra.mxu0 0.0
          %714 = vmatpush.msra.mxu0 0.0
          %715 = vmatpush.msra.mxu0 0.0
          %716 = vmatpush.msra.mxu0 0.0
          %717 = vmatpush.msra.mxu0 0.0
          %718 = vmatpush.msra.mxu0 0.0
          %719 = vmatpush.msra.mxu0 %v700
          %720 = vmatmul.f32.gmra.mxu0 %v702
          %v721 = vpop.f32.mrf.mxu0
          %v722 = vadd.f32 0.0, %v721
          %723 = vdwg.mxu0
          %v724 = vadd.f32 %v698, %v722
          %725 = vst.msk [vmem:[%s273] sm:$0xff] %vm324, %v724
          %s726 = scalar_lea.vmem %s2, 96
          %v727 = vld [vmem:[%s726] sm:$0xff]
          %v728 = vld [vmem:[%s726 + $0x8] sm:$0xff]
          %v729 = vld [vmem:[%s726 + $0x10] sm:$0xff]
          %v730 = vld [vmem:[%s726 + $0x18] sm:$0xff]
          %731 = vmatpush.msra.mxu0 0.0
          %732 = vmatpush.msra.mxu0 0.0
          %733 = vmatpush.msra.mxu0 0.0
          %734 = vmatpush.msra.mxu0 0.0
          %735 = vmatpush.msra.mxu0 0.0
          %736 = vmatpush.msra.mxu0 0.0
          %737 = vmatpush.msra.mxu0 0.0
          %738 = vmatpush.msra.mxu0 0.0
          %739 = vmatpush.msra.mxu0 0.0
          %740 = vmatpush.msra.mxu0 0.0
          %741 = vmatpush.msra.mxu0 0.0
          %742 = vmatpush.msra.mxu0 0.0
          %743 = vmatpush.msra.mxu0 %v730
          %744 = vmatpush.msra.mxu0 %v729
          %745 = vmatpush.msra.mxu0 %v728
          %746 = vmatpush.msra.mxu0 %v727
          %747 = vmatmul.f32.gmra.mxu0 %v331
          %v748 = vpop.f32.mrf.mxu0
          %v749 = vadd.f32 0.0, %v748
          %750 = vdwg.mxu0
          %752 = vrot.lane.b32.xlu0 %v749, 120
          %v753 = vpop.permute.xlu0 %752
          %v754 = vsel %vm356, %v749, 0
          %v756 = vsel %vm356, %v753, 0
          %758 = vmatpush.xpose.msra.mxu0 0.0
          %759 = vmatpush.xpose.msra.mxu0 0.0
          %760 = vmatpush.xpose.msra.mxu0 0.0
          %761 = vmatpush.xpose.msra.mxu0 0.0
          %762 = vmatpush.xpose.msra.mxu0 0.0
          %763 = vmatpush.xpose.msra.mxu0 0.0
          %764 = vmatpush.xpose.msra.mxu0 0.0
          %765 = vmatpush.xpose.msra.mxu0 0.0
          %766 = vmatpush.xpose.msra.mxu0 0.0
          %767 = vmatpush.xpose.msra.mxu0 0.0
          %768 = vmatpush.xpose.msra.mxu0 0.0
          %769 = vmatpush.xpose.msra.mxu0 0.0
          %770 = vmatpush.xpose.msra.mxu0 0.0
          %771 = vmatpush.xpose.msra.mxu0 0.0
          %772 = vmatpush.xpose.msra.mxu0 0.0
          %773 = vmatpush.xpose.msra.mxu0 %v756
          %774 = vmatmul.f32.gmra.mxu0 %v754
          %v775 = vpop.f32.mrf.mxu0
          %v776 = vadd.f32 0.0, %v775
          %777 = vdwg.mxu0
          %s778 = scalar_lea.vmem [#allocation2], 24
          %779 = vst.msk [vmem:[%s778] sm:$0xff] %vm356, %v776
          %v780 = vmul.f32 %v776, %v318
          %vm781 = vcmp.eq.f32.partialorder %v780, 0.0
          %v782 = vsel %vm781, -1e+09, %v780
          %v783 = vmul.f32 %v782, 1.442695
          %v784 = vpow.pop %v783
          %v785 = vsel %vm356, %v784, 0.0
          %786 = vadd.xlane.f32.xlu0 %v785
          %v787 = vpop.xlane.xlu0 %786
          %v788 = vadd.f32 %v787, 1e-06
          %v789 = vadd.f32 %v784, 1.25e-07
          %v790 = vrcp.pop %v788
          %v791 = vmul.f32 %v788, %v790
          %v792 = vsub.f32 1.0, %v791
          %v793 = vmul.f32 %v790, %v792
          %v794 = vadd.f32 %v790, %v793
          %vm795 = vweird.f32 %v788
          %vm796 = vweird.f32 %v790
          %vm797 = vmor %vm795, %vm796
          %v798 = vsel %vm797, %v790, %v794
          %v799 = vand.u32 2147483647, %v788
          %vm800 = vcmp.eq.f32.partialorder %v799, 8.507059e+37
          %v801 = vand.u32 %v788, 2147483648
          %v802 = vor.u32 1.1754944e-38, %v801
          %v803 = vsel %vm800, %v802, %v798
          %v804 = vmul.f32 %v789, %v803
          %805 = vrot.lane.b32.xlu0 %v749, 112
          %v806 = vpop.permute.xlu0 %805
          %v809 = vsel %vm356, %v804, 0
          %811 = vmatpush.msra.mxu0 0.0
          %812 = vmatpush.msra.mxu0 0.0
          %813 = vmatpush.msra.mxu0 0.0
          %814 = vmatpush.msra.mxu0 0.0
          %815 = vmatpush.msra.mxu0 0.0
          %816 = vmatpush.msra.mxu0 0.0
          %817 = vmatpush.msra.mxu0 0.0
          %818 = vmatpush.msra.mxu0 0.0
          %819 = vmatpush.msra.mxu0 0.0
          %820 = vmatpush.msra.mxu0 0.0
          %821 = vmatpush.msra.mxu0 0.0
          %822 = vmatpush.msra.mxu0 0.0
          %823 = vmatpush.msra.mxu0 0.0
          %824 = vmatpush.msra.mxu0 0.0
          %825 = vmatpush.msra.mxu0 0.0
          %826 = vmatpush.msra.mxu0 %v806
          %827 = vmatmul.f32.gmra.mxu0 %v809
          %v828 = vpop.f32.mrf.mxu0
          %v829 = vadd.f32 0.0, %v828
          %830 = vdwg.mxu0
          %v831 = vld [vmem:[%s273] sm:$0xff]
          %s832 = scalar_lea.vmem %s3, 24
          %v833 = vld [vmem:[%s832] sm:$0xff]
          %v835 = vsel %vm356, %v829, 0
          %837 = vmatpush.msra.mxu0 0.0
          %838 = vmatpush.msra.mxu0 0.0
          %839 = vmatpush.msra.mxu0 0.0
          %840 = vmatpush.msra.mxu0 0.0
          %841 = vmatpush.msra.mxu0 0.0
          %842 = vmatpush.msra.mxu0 0.0
          %843 = vmatpush.msra.mxu0 0.0
          %844 = vmatpush.msra.mxu0 0.0
          %845 = vmatpush.msra.mxu0 0.0
          %846 = vmatpush.msra.mxu0 0.0
          %847 = vmatpush.msra.mxu0 0.0
          %848 = vmatpush.msra.mxu0 0.0
          %849 = vmatpush.msra.mxu0 0.0
          %850 = vmatpush.msra.mxu0 0.0
          %851 = vmatpush.msra.mxu0 0.0
          %852 = vmatpush.msra.mxu0 %v833
          %853 = vmatmul.f32.gmra.mxu0 %v835
          %v854 = vpop.f32.mrf.mxu0
          %v855 = vadd.f32 0.0, %v854
          %856 = vdwg.mxu0
          %v857 = vadd.f32 %v831, %v855
          %858 = vst.msk [vmem:[%s273] sm:$0xff] %vm324, %v857
        $region44: #{tpu_custom_call.1} parent=39 // pred_fallthru
          _
        %v859 = vld [vmem:[%s288] sm:$0xff]
        %s860 = smul.u32 %s29, 4
        %v861 = vlaneseq
        %v862 = vand.u32 %v861, 127
        %v863 = vstv %s860
        %vm864 = vcmp.eq.s32.totalorder %v862, %v863
        %v865 = vsel %vm864, 1, 0
        %v866 = vcvt.s32.f32 %v865
        %v867 = vmul.f32 %v859, %v866
        %vm868 = vcmask 31744
        %v870 = vsel %vm868, %v867, 0
        %v873 = vsel %vm868, %v859, 0
        %875 = vmatpush.xpose.msra.mxu0 0.0
        %876 = vmatpush.xpose.msra.mxu0 0.0
        %877 = vmatpush.xpose.msra.mxu0 0.0
        %878 = vmatpush.xpose.msra.mxu0 0.0
        %879 = vmatpush.xpose.msra.mxu0 0.0
        %880 = vmatpush.xpose.msra.mxu0 0.0
        %881 = vmatpush.xpose.msra.mxu0 0.0
        %882 = vmatpush.xpose.msra.mxu0 0.0
        %883 = vmatpush.xpose.msra.mxu0 0.0
        %884 = vmatpush.xpose.msra.mxu0 0.0
        %885 = vmatpush.xpose.msra.mxu0 0.0
        %886 = vmatpush.xpose.msra.mxu0 0.0
        %887 = vmatpush.xpose.msra.mxu0 0.0
        %888 = vmatpush.xpose.msra.mxu0 0.0
        %889 = vmatpush.xpose.msra.mxu0 0.0
        %890 = vmatpush.xpose.msra.mxu0 %v873
        %891 = vmatmul.f32.gmra.mxu0 %v870
        %v892 = vpop.f32.mrf.mxu0
        %v893 = vadd.f32 0.0, %v892
        %894 = vdwg.mxu0
        %v895 = vld [vmem:[#allocation2] sm:$0xff]
        %v896 = vld [vmem:[#allocation2 + $0x8] sm:$0xff]
        %v897 = vld [vmem:[#allocation2 + $0x10] sm:$0xff]
        %v898 = vld [vmem:[#allocation2 + $0x18] sm:$0xff]
        %v899 = vmul.f32 %v895, %v893
        %v900 = vmul.f32 %v896, %v893
        %v901 = vmul.f32 %v897, %v893
        %v902 = vmul.f32 %v898, %v893
        %vm903 = vcmask 64512
        %904 = vst.msk [vmem:[%s280] sm:$0xff] %vm903, %v899
        %905 = vst.msk [vmem:[%s280 + $0x8] sm:$0xff] %vm903, %v900
        %906 = vst.msk [vmem:[%s280 + $0x10] sm:$0xff] %vm903, %v901
        %907 = vst.msk [vmem:[%s280 + $0x18] sm:$0xff] %vm903, %v902
        %s908 = sadd.s32 %s860, 1
        %v909 = vstv %s908
        %vm910 = vcmp.eq.s32.totalorder %v862, %v909
        %v911 = vsel %vm910, 1, 0
        %v912 = vcvt.s32.f32 %v911
        %v913 = vmul.f32 %v859, %v912
        %v915 = vsel %vm868, %v913, 0
        %917 = vmatpush.xpose.msra.mxu0 0.0
        %918 = vmatpush.xpose.msra.mxu0 0.0
        %919 = vmatpush.xpose.msra.mxu0 0.0
        %920 = vmatpush.xpose.msra.mxu0 0.0
        %921 = vmatpush.xpose.msra.mxu0 0.0
        %922 = vmatpush.xpose.msra.mxu0 0.0
        %923 = vmatpush.xpose.msra.mxu0 0.0
        %924 = vmatpush.xpose.msra.mxu0 0.0
        %925 = vmatpush.xpose.msra.mxu0 0.0
        %926 = vmatpush.xpose.msra.mxu0 0.0
        %927 = vmatpush.xpose.msra.mxu0 0.0
        %928 = vmatpush.xpose.msra.mxu0 0.0
        %929 = vmatpush.xpose.msra.mxu0 0.0
        %930 = vmatpush.xpose.msra.mxu0 0.0
        %931 = vmatpush.xpose.msra.mxu0 0.0
        %932 = vmatpush.xpose.msra.mxu0 %v873
        %933 = vmatmul.f32.gmra.mxu0 %v915
        %v934 = vpop.f32.mrf.mxu0
        %v935 = vadd.f32 0.0, %v934
        %936 = vdwg.mxu0
        %v937 = vld [vmem:[#allocation2] sm:$0xff]
        %v938 = vld [vmem:[#allocation2 + $0x8] sm:$0xff]
        %v939 = vld [vmem:[#allocation2 + $0x10] sm:$0xff]
        %v940 = vld [vmem:[#allocation2 + $0x18] sm:$0xff]
        %v941 = vmul.f32 %v937, %v935
        %v942 = vmul.f32 %v938, %v935
        %v943 = vmul.f32 %v939, %v935
        %v944 = vmul.f32 %v940, %v935
        %s945 = scalar_lea.vmem %s280, 32 [#allocation5]
        %946 = vst.msk [vmem:[%s945] sm:$0xff] %vm903, %v941
        %947 = vst.msk [vmem:[%s945 + $0x8] sm:$0xff] %vm903, %v942
        %948 = vst.msk [vmem:[%s945 + $0x10] sm:$0xff] %vm903, %v943
        %949 = vst.msk [vmem:[%s945 + $0x18] sm:$0xff] %vm903, %v944
        %s950 = sadd.s32 %s860, 2
        %v951 = vstv %s950
        %vm952 = vcmp.eq.s32.totalorder %v862, %v951
        %v953 = vsel %vm952, 1, 0
        %v954 = vcvt.s32.f32 %v953
        %v955 = vmul.f32 %v859, %v954
        %v957 = vsel %vm868, %v955, 0
        %959 = vmatpush.xpose.msra.mxu0 0.0
        %960 = vmatpush.xpose.msra.mxu0 0.0
        %961 = vmatpush.xpose.msra.mxu0 0.0
        %962 = vmatpush.xpose.msra.mxu0 0.0
        %963 = vmatpush.xpose.msra.mxu0 0.0
        %964 = vmatpush.xpose.msra.mxu0 0.0
        %965 = vmatpush.xpose.msra.mxu0 0.0
        %966 = vmatpush.xpose.msra.mxu0 0.0
        %967 = vmatpush.xpose.msra.mxu0 0.0
        %968 = vmatpush.xpose.msra.mxu0 0.0
        %969 = vmatpush.xpose.msra.mxu0 0.0
        %970 = vmatpush.xpose.msra.mxu0 0.0
        %971 = vmatpush.xpose.msra.mxu0 0.0
        %972 = vmatpush.xpose.msra.mxu0 0.0
        %973 = vmatpush.xpose.msra.mxu0 0.0
        %974 = vmatpush.xpose.msra.mxu0 %v873
        %975 = vmatmul.f32.gmra.mxu0 %v957
        %v976 = vpop.f32.mrf.mxu0
        %v977 = vadd.f32 0.0, %v976
        %978 = vdwg.mxu0
        %v979 = vld [vmem:[#allocation2] sm:$0xff]
        %v980 = vld [vmem:[#allocation2 + $0x8] sm:$0xff]
        %v981 = vld [vmem:[#allocation2 + $0x10] sm:$0xff]
        %v982 = vld [vmem:[#allocation2 + $0x18] sm:$0xff]
        %v983 = vmul.f32 %v979, %v977
        %v984 = vmul.f32 %v980, %v977
        %v985 = vmul.f32 %v981, %v977
        %v986 = vmul.f32 %v982, %v977
        %s987 = scalar_lea.vmem %s280, 64 [#allocation5]
        %988 = vst.msk [vmem:[%s987] sm:$0xff] %vm903, %v983
        %989 = vst.msk [vmem:[%s987 + $0x8] sm:$0xff] %vm903, %v984
        %990 = vst.msk [vmem:[%s987 + $0x10] sm:$0xff] %vm903, %v985
        %991 = vst.msk [vmem:[%s987 + $0x18] sm:$0xff] %vm903, %v986
        %s992 = sadd.s32 %s860, 3
        %v993 = vstv %s992
        %vm994 = vcmp.eq.s32.totalorder %v862, %v993
        %v995 = vsel %vm994, 1, 0
        %v996 = vcvt.s32.f32 %v995
        %v997 = vmul.f32 %v859, %v996
        %v999 = vsel %vm868, %v997, 0
        %1001 = vmatpush.xpose.msra.mxu0 0.0
        %1002 = vmatpush.xpose.msra.mxu0 0.0
        %1003 = vmatpush.xpose.msra.mxu0 0.0
        %1004 = vmatpush.xpose.msra.mxu0 0.0
        %1005 = vmatpush.xpose.msra.mxu0 0.0
        %1006 = vmatpush.xpose.msra.mxu0 0.0
        %1007 = vmatpush.xpose.msra.mxu0 0.0
        %1008 = vmatpush.xpose.msra.mxu0 0.0
        %1009 = vmatpush.xpose.msra.mxu0 0.0
        %1010 = vmatpush.xpose.msra.mxu0 0.0
        %1011 = vmatpush.xpose.msra.mxu0 0.0
        %1012 = vmatpush.xpose.msra.mxu0 0.0
        %1013 = vmatpush.xpose.msra.mxu0 0.0
        %1014 = vmatpush.xpose.msra.mxu0 0.0
        %1015 = vmatpush.xpose.msra.mxu0 0.0
        %1016 = vmatpush.xpose.msra.mxu0 %v873
        %1017 = vmatmul.f32.gmra.mxu0 %v999
        %v1018 = vpop.f32.mrf.mxu0
        %v1019 = vadd.f32 0.0, %v1018
        %1020 = vdwg.mxu0
        %v1021 = vld [vmem:[#allocation2] sm:$0xff]
        %v1022 = vld [vmem:[#allocation2 + $0x8] sm:$0xff]
        %v1023 = vld [vmem:[#allocation2 + $0x10] sm:$0xff]
        %v1024 = vld [vmem:[#allocation2 + $0x18] sm:$0xff]
        %v1025 = vmul.f32 %v1021, %v1019
        %v1026 = vmul.f32 %v1022, %v1019
        %v1027 = vmul.f32 %v1023, %v1019
        %v1028 = vmul.f32 %v1024, %v1019
        %s1029 = scalar_lea.vmem %s280, 96 [#allocation5]
        %1030 = vst.msk [vmem:[%s1029] sm:$0xff] %vm903, %v1025
        %1031 = vst.msk [vmem:[%s1029 + $0x8] sm:$0xff] %vm903, %v1026
        %1032 = vst.msk [vmem:[%s1029 + $0x10] sm:$0xff] %vm903, %v1027
        %1033 = vst.msk [vmem:[%s1029 + $0x18] sm:$0xff] %vm903, %v1028
        %s1034 = sand.u32 %s159, 1
        %s1035 = scalar_lea.sflag [#allocation4], %s1034
        %s1036 = sand.u32 %s159, 1
        %s1037 = smul.addr %s1036, 8
        %s1038 = scalar_lea.vmem [#allocation3], %s1037
        %s1039 = sand.u32 %s187, 1
        %s1040 = scalar_lea.sflag [#allocation6], %s1039
        %s1041 = sand.u32 %s187, 1
        %s1042 = smul.addr %s1041, 128
        %s1043 = scalar_lea.vmem [#allocation5], %s1042
        // Predicated region
        $region45: #{tpu_custom_call.1} parent=39 // pred_check
          %p1044 = pneg %p169
        $region46: #{tpu_custom_call.1} parent=39 // pred_check_branch
          %1046 = sbr.rel (%p1044) target = $region48
        $region47: #{tpu_custom_call.1} parent=39 // pred_region
          %1048 = vsyncadd %s1035, 0
          %s1049 = smul.addr %s28, 8
          %s1050 = scalar_lea.hbm %s5, %s1049
          %s1052 = sshll.u32 %s1038, 4
          %s1053 = int_to_ptr.vmem [resolvable:$true] %s1052
          %s1054 = sshll.u32 %s1050, 4
          %s1055 = int_to_ptr.hbm [resolvable:$true] %s1054
          %1057 = dma.vmem_to_hbm [thread:$0]  %s1053, 128, %s1055, %s1035
        $region48: #{tpu_custom_call.1} parent=39 // pred_fallthru
          _
        // Predicated region
        $region49: #{tpu_custom_call.1} parent=39 // pred_check
          %p1058 = pneg %p197
        $region50: #{tpu_custom_call.1} parent=39 // pred_check_branch
          %1060 = sbr.rel (%p1058) target = $region52
        $region51: #{tpu_custom_call.1} parent=39 // pred_region
          %s1061 = smul.u32 4, %s29
          %1063 = vsyncadd %s1040, 0
          %s1064 = smul.addr %s1061, 4
          %s1065 = smul.addr %s28, 16
          %s1066 = sadd.s32 %s1064, %s1065
          %s1067 = smul.addr %s1066, 8
          %s1068 = scalar_lea.hbm %s6, %s1067
          %s1069 = sshll.u32 %s1043, 4
          %s1070 = int_to_ptr.vmem [resolvable:$true] %s1069
          %s1071 = sshll.u32 %s1068, 4
          %s1072 = int_to_ptr.hbm [resolvable:$true] %s1071
          %1077 = dma.vmem_to_hbm [thread:$0]  %s1070, 2048, %s1072, %s1040, 128, 128, 8
        $region52: #{tpu_custom_call.1} parent=39 // pred_fallthru
          _
      $region40: #{tpu_custom_call.1} parent=5 // pred_fallthru
        _
      %p1078 = scmp.le.s32.totalorder 2, %s19
      // Predicated region
      $region53: #{tpu_custom_call.1} parent=5 // pred_check
        %p1079 = pneg %p1078
      $region54: #{tpu_custom_call.1} parent=5 // pred_check_branch
        %1081 = sbr.rel (%p1079) target = $region56
      $region55: #{tpu_custom_call.1} parent=5 // pred_region
        %s1082 = ssub.s32 %s19, 2
        // Predicated region
        $region57: #{tpu_custom_call.1} parent=55 // pred_check
          %p1083 = pneg %p175
        $region58: #{tpu_custom_call.1} parent=55 // pred_check_branch
          %1085 = sbr.rel (%p1083) target = $region60
        $region59: #{tpu_custom_call.1} parent=55 // pred_region
          %s1086 = sand.u32 %s160, 1
          %s1087 = scalar_lea.sflag [#allocation4], %s1086
          %s1088 = sand.u32 %s160, 1
          %s1089 = smul.addr %s1088, 8
          %s1090 = scalar_lea.vmem [#allocation3], %s1089
          %1092 = dma.done %s1087, 128
        $region60: #{tpu_custom_call.1} parent=55 // pred_fallthru
          _
        // Predicated region
        $region61: #{tpu_custom_call.1} parent=55 // pred_check
          %p1093 = pneg %p203
        $region62: #{tpu_custom_call.1} parent=55 // pred_check_branch
          %1095 = sbr.rel (%p1093) target = $region64
        $region63: #{tpu_custom_call.1} parent=55 // pred_region
          %s1096 = sand.u32 %s188, 1
          %s1097 = scalar_lea.sflag [#allocation6], %s1096
          %s1098 = sand.u32 %s188, 1
          %s1099 = smul.addr %s1098, 128
          %s1100 = scalar_lea.vmem [#allocation5], %s1099
          %1102 = dma.done %s1097, 2048
        $region64: #{tpu_custom_call.1} parent=55 // pred_fallthru
          _
      $region56: #{tpu_custom_call.1} parent=5 // pred_fallthru
        _
    $region6: #{tpu_custom_call.1} parent=1 // loop_footer
      %s23 = sadd.s32 1, %s19
    $region7: #{tpu_custom_call.1} parent=1 // loop_footer_branch
      %18 = sbr.rel target = $region3
    $region8: #{tpu_custom_call.1} parent=1 // loop_exit
      _
    %1103 = vsyncpa [#allocation4], 1
    %s1104 = scalar_lea.sflag [#allocation4], 1
    %1105 = vsyncpa %s1104, 1
    %1106 = vsyncpa [#allocation6], 1
    %s1107 = scalar_lea.sflag [#allocation6], 1
    %1108 = vsyncpa %s1107, 1

</llo_original>
